<compile_context>
chip_gen: v7x
topology: tpu7x:2x2x1
jax: 0.10.0
libtpu: 0.0.40
codegen_flags: <defaults>
</compile_context>

<pallas_src>
import numpy as np
import jax
import jax.numpy as jnp
from jax import lax
from jax.experimental import pallas as pl
from jax.experimental.pallas import tpu as pltpu

BN_EPS = 1e-5
H1, H2, H3 = 64, 32, 4


def _round_up(x, m):
    return ((x + m - 1) // m) * m


def _tensorcores_per_chip():
    """Best-effort TensorCores-per-JAX-device (2 only on megacore parts).

    Either answer is *correct*; this only decides whether a second "parallel"
    grid step is worth it (review #2/#3)."""
    try:
        dev = jax.devices()[0]
    except Exception:
        return 1
    if getattr(dev, "platform", "") != "tpu":
        return 1
    kind = str(getattr(dev, "device_kind", "")).lower()
    if any(t in kind for t in ("v2", "v3", "v5e", "v5 lite", "v5lite",
                               "v6e", "v6 lite", "v6lite")):
        return 1                                    # 1 TensorCore per device
    if any(t in kind for t in ("v4", "v5p", "v7", "7x")):
        return 2                                    # megacore: 2 TensorCores per device
    for attr in ("num_cores", "core_count"):        # unknown part: probe, default 1
        n = getattr(dev, attr, None)
        if isinstance(n, int) and n >= 1:
            return 2 if n >= 2 else 1
    try:
        n = getattr(pltpu.get_tpu_info(), "num_cores", None)
        if isinstance(n, int) and n >= 1:
            return 2 if n >= 2 else 1
    except Exception:
        pass
    return 1


def make_kernel(B_blk, R_pad, V, E, ws_max, NP, offs):
    rows = B_blk * R_pad
    P = ws_max - 1
    wse = ws_max * E
    off_wcat, off_mask, off_w1, off_w2, off_w3, off_w4, off_vec = offs

    def kernel(tok_ref, emb_ref, slab_ref, out_ref):
        # ---- embedding lookup: in-kernel one-hot + one MXU matmul.
        # Pad rows carry token id -1 -> all-zero one-hot row -> zero embedding row,
        # which is exactly the Conv2d zero padding every branch needs.
        tok = tok_ref[...]                                              # [rows, 1] int32
        iota_v = lax.broadcasted_iota(jnp.int32, (rows, V), 1)
        oh = (tok == iota_v).astype(jnp.float32)                        # [rows, V]
        emb = jnp.dot(oh, emb_ref[...], preferred_element_type=jnp.float32)  # [rows, E]

        # ---- register-level im2col (review #1): column block dt = embedding shifted
        # DOWN by (P - dt) rows via an XLU roll.  No VMEM scratch, no scatter stores.
        # Rolling across example boundaries / around the array only moves zero rows
        # because every example ends in R_pad - T >= P zero rows (asserted in wrapper).
        blocks = [emb if dt == P else pltpu.roll(emb, shift=P - dt, axis=0)
                  for dt in range(ws_max)]
        x = jnp.concatenate(blocks, axis=-1)                            # [rows, ws_max*E]

        # ---- all conv branches in ONE lane-dense matmul (N padded to 128 lanes);
        # conv bias + validity mask come from one slab piece (review #6).
        wcat = slab_ref[pl.ds(off_wcat, wse), :]                        # [ws_max*E, NP]
        scores = jnp.dot(x, wcat, preferred_element_type=jnp.float32)   # [rows, NP]
        maskb = slab_ref[pl.ds(off_mask, R_pad), :]                     # [R_pad, NP]
        act = jnp.tanh(scores.reshape(B_blk, R_pad, NP) + maskb[None, :, :])
        # per-example max-pool over time: one reshape + one reduction (review #7);
        # invalid rows/cols were pushed to tanh(-1e9) = -1 and never win the max.
        pooled = jnp.max(act, axis=1)                                   # [B_blk, NP]

        # ---- MLP: eval-mode BatchNorm and fc biases folded into per-layer scale/shift.
        vec = slab_ref[pl.ds(off_vec, 8), :]                            # [8, NP]

        def layer(h, w_off, s_row):
            w = slab_ref[pl.ds(w_off, NP), :]                           # [NP, NP]
            y = jnp.dot(h, w, preferred_element_type=jnp.float32)
            return jnp.maximum(y * vec[s_row:s_row + 1, :] + vec[s_row + 1:s_row + 2, :],
                               0.0)

        h = layer(pooled, off_w1, 0)
        h = layer(h, off_w2, 2)
        h = layer(h, off_w3, 4)
        w4 = slab_ref[pl.ds(off_w4, NP), :]
        logits = jnp.dot(h, w4, preferred_element_type=jnp.float32) + vec[6:7, :]
        out_ref[0] = jax.nn.sigmoid(logits)                             # [B_blk, NP] lane-dense

    return kernel


def sentiment_cnn_forward(tokens, params, kernels, num_filters, output_size):
    B, T = tokens.shape
    V, E = params["emb"].shape
    F = num_filters
    K = len(kernels)
    ws_max = max(kernels)
    P = ws_max - 1
    R = T + P                       # common conv-output row count (all branches end here)
    R_pad = _round_up(R, 8)
    WSE = ws_max * E
    KF = K * F
    NP = 128                        # lane width of the packed slab / every padded feature dim

    # roll-based im2col invariant: rows that wrap must all be zero padding
    assert R_pad - T >= P, (R_pad, T, P)
    assert E % 8 == 0 and WSE % 8 == 0
    assert KF <= NP and H1 <= NP and H2 <= NP and H3 <= NP and output_size <= NP

    # One grid step per TensorCore (review #2/#3): G=2 only on megacore parts.
    G = 2 if (_tensorcores_per_chip() >= 2 and B % 2 == 0) else 1
    B_blk = B // G

    # ---- tokens: pad each example to R_pad rows with sentinel -1 (=> zero embedding row)
    tok_pad = jnp.full((B, R_pad), -1, jnp.int32).at[:, :T].set(tokens.astype(jnp.int32))
    tok_pad = tok_pad.reshape(B * R_pad, 1)

    # ---- pack ALL parameters into one lane-dense [*, 128] f32 slab (review #5) --------
    # fused conv weight: rows dt*E:(dt+1)*E hold tap-dt weights of every branch
    wcat = jnp.zeros((WSE, NP), jnp.float32)
    for k, ws in enumerate(kernels):
        wk = jnp.transpose(params["conv_w"][k][:, 0], (1, 2, 0)).reshape(ws * E, F)
        wcat = wcat.at[:ws * E, k * F:(k + 1) * F].set(wk)

    # validity mask with the conv bias folded in: valid (row, col) -> bias, else -1e9
    maskb = jnp.full((R_pad, NP), -1e9, jnp.float32)
    for k, ws in enumerate(kernels):
        maskb = maskb.at[P - ws + 1:R, k * F:(k + 1) * F].set(params["conv_b"][k])

    # fc1 rows reordered from torch's filter-major (f*K + k) layout to branch-major (k*F + f)
    w1r = params["fc1_w"].T.reshape(F, K, H1).transpose(1, 0, 2).reshape(KF, H1)

    def pad2(w):
        out = jnp.zeros((NP, NP), jnp.float32)
        return out.at[:w.shape[0], :w.shape[1]].set(w.astype(jnp.float32))

    w1p = pad2(w1r)
    w2p = pad2(params["fc2_w"].T)
    w3p = pad2(params["fc3_w"].T)
    w4p = pad2(params["fc4_w"].T)

    def bn_fold(prefix, fc_b):      # eval-mode BN + fc bias folded into (scale, shift)
        s = params[f"{prefix}_g"] / jnp.sqrt(params[f"{prefix}_v"] + BN_EPS)
        t = (fc_b - params[f"{prefix}_m"]) * s + params[f"{prefix}_b"]
        return s, t

    s1, t1 = bn_fold("bn1", params["fc1_b"])
    s2, t2 = bn_fold("bn2", params["fc2_b"])
    s3, t3 = bn_fold("bn3", params["fc3_b"])

    def padv(v):
        return jnp.zeros((NP,), jnp.float32).at[:v.shape[0]].set(v.astype(jnp.float32))

    vec = jnp.stack([padv(v) for v in (s1, t1, s2, t2, s3, t3, params["fc4_b"],
                                       jnp.zeros((1,), jnp.float32))], axis=0)   # [8, NP]

    off_wcat = 0
    off_mask = off_wcat + WSE
    off_w1 = off_mask + R_pad
    off_w2 = off_w1 + NP
    off_w3 = off_w2 + NP
    off_w4 = off_w3 + NP
    off_vec = off_w4 + NP
    slab_rows = off_vec + 8
    slab = jnp.concatenate([wcat, maskb, w1p, w2p, w3p, w4p, vec], axis=0)
    assert slab.shape == (slab_rows, NP)

    kern = make_kernel(B_blk, R_pad, V, E, ws_max, NP,
                       (off_wcat, off_mask, off_w1, off_w2, off_w3, off_w4, off_vec))

    out = pl.pallas_call(
        kern,
        out_shape=jax.ShapeDtypeStruct((G, B_blk, NP), jnp.float32),
        grid=(G,),
        in_specs=[
            pl.BlockSpec((B_blk * R_pad, 1), lambda g: (g, 0)),   # tokens: per-core slice
            pl.BlockSpec((V, E), lambda g: (0, 0)),               # embedding table
            pl.BlockSpec((slab_rows, NP), lambda g: (0, 0)),      # packed parameter slab
        ],
        out_specs=pl.BlockSpec((1, B_blk, NP), lambda g: (g, 0, 0)),
        compiler_params=pltpu.CompilerParams(dimension_semantics=("parallel",)),
    )(tok_pad, params["emb"].astype(jnp.float32), slab)
    return out.reshape(B, NP)[:, :output_size]


def reference_forward(tokens, params, kernels, num_filters, output_size):
    """Pure-JAX re-statement of the PyTorch forward (eval-mode BatchNorm)."""
    B, T = tokens.shape
    F = num_filters
    K = len(kernels)
    emb = params["emb"][tokens]                                         # [B, T, E]
    xs = []
    for k, ws in enumerate(kernels):
        pad = jnp.pad(emb, ((0, 0), (ws - 1, ws - 1), (0, 0)))
        Tout = T + ws - 1
        sc = jnp.zeros((B, Tout, F), jnp.float32)
        for dt in range(ws):
            sc = sc + jnp.einsum("bte,fe->btf", pad[:, dt:dt + Tout],
                                 params["conv_w"][k][:, 0, dt, :])
        sc = sc + params["conv_b"][k]
        xs.append(jnp.max(jnp.tanh(sc), axis=1))                        # [B, F]
    feats = jnp.stack(xs, axis=-1).reshape(B, F * K)                    # cat(dim=2) + view

    def bn(x, g, bb, m, v):
        return (x - m) / jnp.sqrt(v + BN_EPS) * g + bb

    h = feats @ params["fc1_w"].T + params["fc1_b"]
    h = jax.nn.relu(bn(h, params["bn1_g"], params["bn1_b"], params["bn1_m"], params["bn1_v"]))
    h = h @ params["fc2_w"].T + params["fc2_b"]
    h = jax.nn.relu(bn(h, params["bn2_g"], params["bn2_b"], params["bn2_m"], params["bn2_v"]))
    h = h @ params["fc3_w"].T + params["fc3_b"]
    h = jax.nn.relu(bn(h, params["bn3_g"], params["bn3_b"], params["bn3_m"], params["bn3_v"]))
    h = h @ params["fc4_w"].T + params["fc4_b"]
    return 1.0 / (1.0 + jnp.exp(-h))


def init_params(key, V, E, kernels, F, output_size):
    K = len(kernels)
    ks = jax.random.split(key, 16)
    params = {
        "emb": jax.random.normal(ks[0], (V, E), jnp.float32) * 0.5,
        "conv_w": [jax.random.normal(ks[1 + i], (F, 1, ws, E), jnp.float32) * 0.2
                   for i, ws in enumerate(kernels)],
        "conv_b": [jax.random.normal(ks[4 + i], (F,), jnp.float32) * 0.1
                   for i in range(K)],
        "fc1_w": jax.random.normal(ks[7], (H1, F * K), jnp.float32) * 0.2,
        "fc1_b": jax.random.normal(ks[8], (H1,), jnp.float32) * 0.1,
        "fc2_w": jax.random.normal(ks[9], (H2, H1), jnp.float32) * 0.2,
        "fc2_b": jax.random.normal(ks[10], (H2,), jnp.float32) * 0.1,
        "fc3_w": jax.random.normal(ks[11], (H3, H2), jnp.float32) * 0.2,
        "fc3_b": jax.random.normal(ks[12], (H3,), jnp.float32) * 0.1,
        "fc4_w": jax.random.normal(ks[13], (output_size, H3), jnp.float32) * 0.2,
        "fc4_b": jax.random.normal(ks[14], (output_size,), jnp.float32) * 0.1,
    }
    # BatchNorm1d defaults (eval mode): weight=1, bias=0, running_mean=0, running_var=1
    for name, n in (("bn1", H1), ("bn2", H2), ("bn3", H3)):
        params[f"{name}_g"] = jnp.ones((n,), jnp.float32)
        params[f"{name}_b"] = jnp.zeros((n,), jnp.float32)
        params[f"{name}_m"] = jnp.zeros((n,), jnp.float32)
        params[f"{name}_v"] = jnp.ones((n,), jnp.float32)
    return params


if __name__ == "__main__":
    B, T, V, E = 8, 16, 64, 32
    kernels = (2, 3, 4)
    num_filters = 4
    output_size = 2

    key = jax.random.PRNGKey(0)
    pkey, tkey = jax.random.split(key)
    params = init_params(pkey, V, E, kernels, num_filters, output_size)
    tokens = jax.random.randint(tkey, (B, T), 0, V, dtype=jnp.int32)

    out = sentiment_cnn_forward(tokens, params, kernels, num_filters, output_size)
    out = jax.block_until_ready(out)

    ref = reference_forward(tokens, params, kernels, num_filters, output_size)
    ref = jax.block_until_ready(ref)

    assert out.shape == (B, output_size), out.shape
    max_err = float(jnp.max(jnp.abs(out - ref)))
    assert np.isfinite(max_err) and max_err < 1e-3, f"max abs err {max_err}"
    print("KERNEL_OK")
</pallas_src>

<mosaic_0001>
module attributes {stable_mosaic.version = 11 : i64} {
  func.func @kernel(%arg0: i32, %arg1: memref<192x1xi32, #tpu.memory_space<vmem>>, %arg2: memref<64x32xf32, #tpu.memory_space<vmem>>, %arg3: memref<672x128xf32, #tpu.memory_space<vmem>>, %arg4: memref<1x8x128xf32, #tpu.memory_space<vmem>>) attributes {dimension_semantics = [#tpu.dimension_semantics<parallel>], iteration_bounds = array<i64: 1>, scalar_prefetch = 0 : i64, scratch_operands = 0 : i64, tpu.core_type = #tpu.core_type<tc>, window_params = [{transform_indices = @transform_0, window_bounds = array<i64: 192, 1>}, {pipeline_mode = #tpu.pipeline_mode<synchronous>, transform_indices = @transform_1, window_bounds = array<i64: 64, 32>}, {pipeline_mode = #tpu.pipeline_mode<synchronous>, transform_indices = @transform_2, window_bounds = array<i64: 672, 128>}, {transform_indices = @transform_3, window_bounds = array<i64: 1, 8, 128>}]} {
    %c0 = arith.constant 0 : index
    %c0_0 = arith.constant 0 : index
    %0 = vector.load %arg1[%c0, %c0_0] : memref<192x1xi32, #tpu.memory_space<vmem>>, vector<192x1xi32>
    %1 = tpu.iota {dimensions = array<i32: 1>} : vector<192x64xi32>
    %2 = vector.broadcast %0 : vector<192x1xi32> to vector<192x64xi32>
    %3 = arith.cmpi eq, %2, %1 : vector<192x64xi32>
    %4 = arith.extui %3 : vector<192x64xi1> to vector<192x64xi32>
    %5 = arith.sitofp %4 : vector<192x64xi32> to vector<192x64xf32>
    %c0_1 = arith.constant 0 : index
    %c0_2 = arith.constant 0 : index
    %6 = vector.load %arg2[%c0_1, %c0_2] : memref<64x32xf32, #tpu.memory_space<vmem>>, vector<64x32xf32>
    %cst = arith.constant dense<0.000000e+00> : vector<192x32xf32>
    %7 = tpu.matmul %5, %6, %cst {dimension_numbers = #tpu.dot_dimension_numbers<[1], [0], [0], [1], [0, 0, 1, 1], [], []>} : vector<192x64xf32>, vector<64x32xf32>, vector<192x32xf32> -> vector<192x32xf32>
    %c3_i32 = arith.constant 3 : i32
    %8 = tpu.dynamic_rotate %7 by %c3_i32 dim 0 : vector<192x32xf32>, i32 -> vector<192x32xf32>
    %c2_i32 = arith.constant 2 : i32
    %9 = tpu.dynamic_rotate %7 by %c2_i32 dim 0 : vector<192x32xf32>, i32 -> vector<192x32xf32>
    %c1_i32 = arith.constant 1 : i32
    %10 = tpu.dynamic_rotate %7 by %c1_i32 dim 0 : vector<192x32xf32>, i32 -> vector<192x32xf32>
    %11 = tpu.concatenate %8, %9, %10, %7 in 1 : vector<192x32xf32>, vector<192x32xf32>, vector<192x32xf32>, vector<192x32xf32> -> vector<192x128xf32>
    %c0_3 = arith.constant 0 : index
    %c0_4 = arith.constant 0 : index
    %12 = vector.load %arg3[%c0_3, %c0_4] : memref<672x128xf32, #tpu.memory_space<vmem>>, vector<128x128xf32>
    %cst_5 = arith.constant dense<0.000000e+00> : vector<192x128xf32>
    %13 = tpu.matmul %11, %12, %cst_5 {dimension_numbers = #tpu.dot_dimension_numbers<[1], [0], [0], [1], [0, 0, 1, 1], [], []>} : vector<192x128xf32>, vector<128x128xf32>, vector<192x128xf32> -> vector<192x128xf32>
    %c128 = arith.constant 128 : index
    %c0_6 = arith.constant 0 : index
    %14 = vector.load %arg3[%c128, %c0_6] : memref<672x128xf32, #tpu.memory_space<vmem>>, vector<24x128xf32>
    %15 = vector.shape_cast %13 : vector<192x128xf32> to vector<8x24x128xf32>
    %16 = vector.shape_cast %14 : vector<24x128xf32> to vector<1x24x128xf32>
    %17 = vector.broadcast %16 : vector<1x24x128xf32> to vector<8x24x128xf32>
    %18 = arith.addf %15, %17 : vector<8x24x128xf32>
    %19 = math.tanh %18 : vector<8x24x128xf32>
    %cst_7 = arith.constant dense<0xFF800000> : vector<8x128xf32>
    %20 = vector.multi_reduction <maximumf>, %19, %cst_7 [1] : vector<8x24x128xf32> to vector<8x128xf32>
    %c664 = arith.constant 664 : index
    %c0_8 = arith.constant 0 : index
    %21 = vector.load %arg3[%c664, %c0_8] : memref<672x128xf32, #tpu.memory_space<vmem>>, vector<8x128xf32>
    %c152 = arith.constant 152 : index
    %c0_9 = arith.constant 0 : index
    %22 = vector.load %arg3[%c152, %c0_9] : memref<672x128xf32, #tpu.memory_space<vmem>>, vector<128x128xf32>
    %cst_10 = arith.constant dense<0.000000e+00> : vector<8x128xf32>
    %23 = tpu.matmul %20, %22, %cst_10 {dimension_numbers = #tpu.dot_dimension_numbers<[1], [0], [0], [1], [0, 0, 1, 1], [], []>} : vector<8x128xf32>, vector<128x128xf32>, vector<8x128xf32> -> vector<8x128xf32>
    %24 = vector.extract_strided_slice %21 {offsets = [0, 0], sizes = [1, 128], strides = [1, 1]} : vector<8x128xf32> to vector<1x128xf32>
    %25 = vector.broadcast %24 : vector<1x128xf32> to vector<8x128xf32>
    %26 = arith.mulf %23, %25 : vector<8x128xf32>
    %27 = vector.extract_strided_slice %21 {offsets = [1, 0], sizes = [1, 128], strides = [1, 1]} : vector<8x128xf32> to vector<1x128xf32>
    %28 = vector.broadcast %27 : vector<1x128xf32> to vector<8x128xf32>
    %29 = arith.addf %26, %28 : vector<8x128xf32>
    %cst_11 = arith.constant 0.000000e+00 : f32
    %30 = vector.broadcast %cst_11 : f32 to vector<8x128xf32>
    %31 = arith.maximumf %29, %30 : vector<8x128xf32>
    %c280 = arith.constant 280 : index
    %c0_12 = arith.constant 0 : index
    %32 = vector.load %arg3[%c280, %c0_12] : memref<672x128xf32, #tpu.memory_space<vmem>>, vector<128x128xf32>
    %cst_13 = arith.constant dense<0.000000e+00> : vector<8x128xf32>
    %33 = tpu.matmul %31, %32, %cst_13 {dimension_numbers = #tpu.dot_dimension_numbers<[1], [0], [0], [1], [0, 0, 1, 1], [], []>} : vector<8x128xf32>, vector<128x128xf32>, vector<8x128xf32> -> vector<8x128xf32>
    %34 = vector.extract_strided_slice %21 {offsets = [2, 0], sizes = [1, 128], strides = [1, 1]} : vector<8x128xf32> to vector<1x128xf32>
    %35 = vector.broadcast %34 : vector<1x128xf32> to vector<8x128xf32>
    %36 = arith.mulf %33, %35 : vector<8x128xf32>
    %37 = vector.extract_strided_slice %21 {offsets = [3, 0], sizes = [1, 128], strides = [1, 1]} : vector<8x128xf32> to vector<1x128xf32>
    %38 = vector.broadcast %37 : vector<1x128xf32> to vector<8x128xf32>
    %39 = arith.addf %36, %38 : vector<8x128xf32>
    %cst_14 = arith.constant 0.000000e+00 : f32
    %40 = vector.broadcast %cst_14 : f32 to vector<8x128xf32>
    %41 = arith.maximumf %39, %40 : vector<8x128xf32>
    %c408 = arith.constant 408 : index
    %c0_15 = arith.constant 0 : index
    %42 = vector.load %arg3[%c408, %c0_15] : memref<672x128xf32, #tpu.memory_space<vmem>>, vector<128x128xf32>
    %cst_16 = arith.constant dense<0.000000e+00> : vector<8x128xf32>
    %43 = tpu.matmul %41, %42, %cst_16 {dimension_numbers = #tpu.dot_dimension_numbers<[1], [0], [0], [1], [0, 0, 1, 1], [], []>} : vector<8x128xf32>, vector<128x128xf32>, vector<8x128xf32> -> vector<8x128xf32>
    %44 = vector.extract_strided_slice %21 {offsets = [4, 0], sizes = [1, 128], strides = [1, 1]} : vector<8x128xf32> to vector<1x128xf32>
    %45 = vector.broadcast %44 : vector<1x128xf32> to vector<8x128xf32>
    %46 = arith.mulf %43, %45 : vector<8x128xf32>
    %47 = vector.extract_strided_slice %21 {offsets = [5, 0], sizes = [1, 128], strides = [1, 1]} : vector<8x128xf32> to vector<1x128xf32>
    %48 = vector.broadcast %47 : vector<1x128xf32> to vector<8x128xf32>
    %49 = arith.addf %46, %48 : vector<8x128xf32>
    %cst_17 = arith.constant 0.000000e+00 : f32
    %50 = vector.broadcast %cst_17 : f32 to vector<8x128xf32>
    %51 = arith.maximumf %49, %50 : vector<8x128xf32>
    %c536 = arith.constant 536 : index
    %c0_18 = arith.constant 0 : index
    %52 = vector.load %arg3[%c536, %c0_18] : memref<672x128xf32, #tpu.memory_space<vmem>>, vector<128x128xf32>
    %cst_19 = arith.constant dense<0.000000e+00> : vector<8x128xf32>
    %53 = tpu.matmul %51, %52, %cst_19 {dimension_numbers = #tpu.dot_dimension_numbers<[1], [0], [0], [1], [0, 0, 1, 1], [], []>} : vector<8x128xf32>, vector<128x128xf32>, vector<8x128xf32> -> vector<8x128xf32>
    %54 = vector.extract_strided_slice %21 {offsets = [6, 0], sizes = [1, 128], strides = [1, 1]} : vector<8x128xf32> to vector<1x128xf32>
    %55 = vector.broadcast %54 : vector<1x128xf32> to vector<8x128xf32>
    %56 = arith.addf %53, %55 : vector<8x128xf32>
    %57 = arith.negf %56 : vector<8x128xf32>
    %58 = math.exp %57 : vector<8x128xf32>
    %cst_20 = arith.constant 1.000000e+00 : f32
    %59 = vector.broadcast %cst_20 : f32 to vector<8x128xf32>
    %60 = arith.addf %59, %58 : vector<8x128xf32>
    %61 = arith.divf %59, %60 : vector<8x128xf32>
    %c0_21 = arith.constant 0 : index
    %c0_22 = arith.constant 0 : index
    %c0_23 = arith.constant 0 : index
    %62 = vector.load %arg4[%c0_21, %c0_22, %c0_23] : memref<1x8x128xf32, #tpu.memory_space<vmem>>, vector<1x8x128xf32>
    %63 = vector.shape_cast %62 : vector<1x8x128xf32> to vector<8x128xf32>
    %64 = vector.shape_cast %61 : vector<8x128xf32> to vector<1x8x128xf32>
    tpu.vector_store %arg4[%c0_21, %c0_22, %c0_23], %64 {strides = array<i32>} : memref<1x8x128xf32, #tpu.memory_space<vmem>>, vector<1x8x128xf32>,
    return
  }
  func.func @transform_0(%arg0: i32) -> (i32, i32) {
    %c0_i32 = arith.constant 0 : i32
    %c0_i32_0 = arith.constant 0 : i32
    return %arg0, %c0_i32 : i32, i32
  }
  func.func @transform_1(%arg0: i32) -> (i32, i32) {
    %c0_i32 = arith.constant 0 : i32
    %c0_i32_0 = arith.constant 0 : i32
    %c0_i32_1 = arith.constant 0 : i32
    return %c0_i32, %c0_i32_0 : i32, i32
  }
  func.func @transform_2(%arg0: i32) -> (i32, i32) {
    %c0_i32 = arith.constant 0 : i32
    %c0_i32_0 = arith.constant 0 : i32
    %c0_i32_1 = arith.constant 0 : i32
    return %c0_i32, %c0_i32_0 : i32, i32
  }
  func.func @transform_3(%arg0: i32) -> (i32, i32, i32) {
    %c0_i32 = arith.constant 0 : i32
    %c0_i32_0 = arith.constant 0 : i32
    %c0_i32_1 = arith.constant 0 : i32
    return %arg0, %c0_i32, %c0_i32_0 : i32, i32, i32
  }
}

</mosaic_0001>

<llo_original>
// kernel: tpu_custom_call.1
$region0: #{tpu_custom_call.1}
  #allocation0 [shape = 'u32[]', space=smem, size = 0x4, offset = 0x4, fixed_abs, tag = 'smem constant byte address 0x4 - core index']
  #allocation1 [shape = 'u32[144,128]{1,0:T(1,128)}', space=vmem, size = 0x12000, scoped, tag = 'internal scratch']
  %s0 = inlined_call_operand.vmem [shape: s32[192,1], index: 0, kind: input, shape index: {}]
  %s1 = inlined_call_operand.vmem [shape: f32[64,32], index: 1, kind: input, shape index: {}]
  %s2 = inlined_call_operand.hbm [shape: f32[672,128], index: 2, kind: input, shape index: {}]
  %s3 = inlined_call_operand.hbm [shape: f32[1,8,128], index: 3, kind: output, shape index: {}]
  %s4 = sld [smem:[#allocation0]]
  $region26: #{tpu_custom_call.1} parent=0
    _
  %s6 = ssub.s32 1, %s4
  %s7 = scalar_select 0, %s6, %s4
  $region1: #{tpu_custom_call.1} parent=0
    #allocation2 [shape = 'u8[344064]{0}', space=vmem, size = 0x54000, scoped, tag = 'input window, operand 2, single buffered']
    #allocation3 [shape = 's32[1]{0}', space=sflag, size = 0x4, scoped, tag = 'scoped memory for tpu_custom_call.1']
    #allocation4 [shape = 's32[1]{0}', space=sflag, size = 0x4, scoped, tag = 'scoped memory for tpu_custom_call.1']
    #allocation5 [shape = 'u8[4096]{0}', space=vmem, size = 0x1000, scoped, tag = 'output window, operand 0, single buffered']
    %8 = vsyncpa [#allocation3], 0
    %9 = vsyncpa [#allocation4], 0
    // Predicated region
    $region2: #{tpu_custom_call.1} parent=1 // pred_check
      _
    $region3: #{tpu_custom_call.1} parent=1 // pred_check_branch
      %11 = sbr.rel (0) target = $region5
    $region4: #{tpu_custom_call.1} parent=1 // pred_region
      _
    $region5: #{tpu_custom_call.1} parent=1 // pred_fallthru
      _
    // Predicated region
    $region6: #{tpu_custom_call.1} parent=1 // pred_check
      _
    $region7: #{tpu_custom_call.1} parent=1 // pred_check_branch
      %13 = sbr.rel (0) target = $region9
    $region8: #{tpu_custom_call.1} parent=1 // pred_region
      _
    $region9: #{tpu_custom_call.1} parent=1 // pred_fallthru
      _
    // Predicated region
    $region10: #{tpu_custom_call.1} parent=1 // pred_check
      _
    $region11: #{tpu_custom_call.1} parent=1 // pred_check_branch
      %15 = sbr.rel (0) target = $region13
    $region12: #{tpu_custom_call.1} parent=1 // pred_region
      %s17 = ssub.s32 10752, 10752
      %18 = vsyncadd [#allocation3], %s17
      %s19 = sshll.u32 [#allocation2], 4
      %s20 = int_to_ptr.vmem [resolvable:$true] %s19
      %25 = dma.hbm_to_vmem [thread:$0]  %s2, 10752, %s20, [#allocation3], 128, 128, 8
    $region13: #{tpu_custom_call.1} parent=1 // pred_fallthru
      _
    // Predicated region
    $region14: #{tpu_custom_call.1} parent=1 // pred_check
      _
    $region15: #{tpu_custom_call.1} parent=1 // pred_check_branch
      %27 = sbr.rel (0) target = $region17
    $region16: #{tpu_custom_call.1} parent=1 // pred_region
      %28 = dma.done [#allocation3], 10752
    $region17: #{tpu_custom_call.1} parent=1 // pred_fallthru
      _
    %v29 = vld [vmem:[%s0] sm:$0xff]
    %v30 = vld [vmem:[%s0 + $0x8] sm:$0xff]
    %v31 = vld [vmem:[%s0 + $0x10] sm:$0xff]
    %v32 = vld [vmem:[%s0 + $0x18] sm:$0xff]
    %v33 = vld [vmem:[%s0 + $0x20] sm:$0xff]
    %v34 = vld [vmem:[%s0 + $0x28] sm:$0xff]
    %v35 = vld [vmem:[%s0 + $0x30] sm:$0xff]
    %v36 = vld [vmem:[%s0 + $0x38] sm:$0xff]
    %v37 = vld [vmem:[%s0 + $0x40] sm:$0xff]
    %v38 = vld [vmem:[%s0 + $0x48] sm:$0xff]
    %v39 = vld [vmem:[%s0 + $0x50] sm:$0xff]
    %v40 = vld [vmem:[%s0 + $0x58] sm:$0xff]
    %v41 = vld [vmem:[%s0 + $0x60] sm:$0xff]
    %v42 = vld [vmem:[%s0 + $0x68] sm:$0xff]
    %v43 = vld [vmem:[%s0 + $0x70] sm:$0xff]
    %v44 = vld [vmem:[%s0 + $0x78] sm:$0xff]
    %v45 = vld [vmem:[%s0 + $0x80] sm:$0xff]
    %v46 = vld [vmem:[%s0 + $0x88] sm:$0xff]
    %v47 = vld [vmem:[%s0 + $0x90] sm:$0xff]
    %v48 = vld [vmem:[%s0 + $0x98] sm:$0xff]
    %v49 = vld [vmem:[%s0 + $0xa0] sm:$0xff]
    %v50 = vld [vmem:[%s0 + $0xa8] sm:$0xff]
    %v51 = vld [vmem:[%s0 + $0xb0] sm:$0xff]
    %v52 = vld [vmem:[%s0 + $0xb8] sm:$0xff]
    %v53 = vlaneseq
    %v54 = vand.u32 %v53, 127
    %55 = vset.pattern.permute.xlu0 0
    %56 = vperm.xlu0 %55, %v29
    %v57 = vpop.permute.xlu0 %56
    %58 = vset.pattern.permute.xlu0 0
    %59 = vperm.xlu0 %58, %v30
    %v60 = vpop.permute.xlu0 %59
    %61 = vset.pattern.permute.xlu0 0
    %62 = vperm.xlu0 %61, %v31
    %v63 = vpop.permute.xlu0 %62
    %64 = vset.pattern.permute.xlu0 0
    %65 = vperm.xlu0 %64, %v32
    %v66 = vpop.permute.xlu0 %65
    %67 = vset.pattern.permute.xlu0 0
    %68 = vperm.xlu0 %67, %v33
    %v69 = vpop.permute.xlu0 %68
    %70 = vset.pattern.permute.xlu0 0
    %71 = vperm.xlu0 %70, %v34
    %v72 = vpop.permute.xlu0 %71
    %73 = vset.pattern.permute.xlu0 0
    %74 = vperm.xlu0 %73, %v35
    %v75 = vpop.permute.xlu0 %74
    %76 = vset.pattern.permute.xlu0 0
    %77 = vperm.xlu0 %76, %v36
    %v78 = vpop.permute.xlu0 %77
    %79 = vset.pattern.permute.xlu0 0
    %80 = vperm.xlu0 %79, %v37
    %v81 = vpop.permute.xlu0 %80
    %82 = vset.pattern.permute.xlu0 0
    %83 = vperm.xlu0 %82, %v38
    %v84 = vpop.permute.xlu0 %83
    %85 = vset.pattern.permute.xlu0 0
    %86 = vperm.xlu0 %85, %v39
    %v87 = vpop.permute.xlu0 %86
    %88 = vset.pattern.permute.xlu0 0
    %89 = vperm.xlu0 %88, %v40
    %v90 = vpop.permute.xlu0 %89
    %91 = vset.pattern.permute.xlu0 0
    %92 = vperm.xlu0 %91, %v41
    %v93 = vpop.permute.xlu0 %92
    %94 = vset.pattern.permute.xlu0 0
    %95 = vperm.xlu0 %94, %v42
    %v96 = vpop.permute.xlu0 %95
    %97 = vset.pattern.permute.xlu0 0
    %98 = vperm.xlu0 %97, %v43
    %v99 = vpop.permute.xlu0 %98
    %100 = vset.pattern.permute.xlu0 0
    %101 = vperm.xlu0 %100, %v44
    %v102 = vpop.permute.xlu0 %101
    %103 = vset.pattern.permute.xlu0 0
    %104 = vperm.xlu0 %103, %v45
    %v105 = vpop.permute.xlu0 %104
    %106 = vset.pattern.permute.xlu0 0
    %107 = vperm.xlu0 %106, %v46
    %v108 = vpop.permute.xlu0 %107
    %109 = vset.pattern.permute.xlu0 0
    %110 = vperm.xlu0 %109, %v47
    %v111 = vpop.permute.xlu0 %110
    %112 = vset.pattern.permute.xlu0 0
    %113 = vperm.xlu0 %112, %v48
    %v114 = vpop.permute.xlu0 %113
    %115 = vset.pattern.permute.xlu0 0
    %116 = vperm.xlu0 %115, %v49
    %v117 = vpop.permute.xlu0 %116
    %118 = vset.pattern.permute.xlu0 0
    %119 = vperm.xlu0 %118, %v50
    %v120 = vpop.permute.xlu0 %119
    %121 = vset.pattern.permute.xlu0 0
    %122 = vperm.xlu0 %121, %v51
    %v123 = vpop.permute.xlu0 %122
    %124 = vset.pattern.permute.xlu0 0
    %125 = vperm.xlu0 %124, %v52
    %v126 = vpop.permute.xlu0 %125
    %vm127 = vcmp.eq.s32.totalorder %v57, %v54
    %vm128 = vcmp.eq.s32.totalorder %v60, %v54
    %vm129 = vcmp.eq.s32.totalorder %v63, %v54
    %vm130 = vcmp.eq.s32.totalorder %v66, %v54
    %vm131 = vcmp.eq.s32.totalorder %v69, %v54
    %vm132 = vcmp.eq.s32.totalorder %v72, %v54
    %vm133 = vcmp.eq.s32.totalorder %v75, %v54
    %vm134 = vcmp.eq.s32.totalorder %v78, %v54
    %vm135 = vcmp.eq.s32.totalorder %v81, %v54
    %vm136 = vcmp.eq.s32.totalorder %v84, %v54
    %vm137 = vcmp.eq.s32.totalorder %v87, %v54
    %vm138 = vcmp.eq.s32.totalorder %v90, %v54
    %vm139 = vcmp.eq.s32.totalorder %v93, %v54
    %vm140 = vcmp.eq.s32.totalorder %v96, %v54
    %vm141 = vcmp.eq.s32.totalorder %v99, %v54
    %vm142 = vcmp.eq.s32.totalorder %v102, %v54
    %vm143 = vcmp.eq.s32.totalorder %v105, %v54
    %vm144 = vcmp.eq.s32.totalorder %v108, %v54
    %vm145 = vcmp.eq.s32.totalorder %v111, %v54
    %vm146 = vcmp.eq.s32.totalorder %v114, %v54
    %vm147 = vcmp.eq.s32.totalorder %v117, %v54
    %vm148 = vcmp.eq.s32.totalorder %v120, %v54
    %vm149 = vcmp.eq.s32.totalorder %v123, %v54
    %vm150 = vcmp.eq.s32.totalorder %v126, %v54
    %v151 = vsel %vm127, 1, 0
    %v152 = vsel %vm128, 1, 0
    %v153 = vsel %vm129, 1, 0
    %v154 = vsel %vm130, 1, 0
    %v155 = vsel %vm131, 1, 0
    %v156 = vsel %vm132, 1, 0
    %v157 = vsel %vm133, 1, 0
    %v158 = vsel %vm134, 1, 0
    %v159 = vsel %vm135, 1, 0
    %v160 = vsel %vm136, 1, 0
    %v161 = vsel %vm137, 1, 0
    %v162 = vsel %vm138, 1, 0
    %v163 = vsel %vm139, 1, 0
    %v164 = vsel %vm140, 1, 0
    %v165 = vsel %vm141, 1, 0
    %v166 = vsel %vm142, 1, 0
    %v167 = vsel %vm143, 1, 0
    %v168 = vsel %vm144, 1, 0
    %v169 = vsel %vm145, 1, 0
    %v170 = vsel %vm146, 1, 0
    %v171 = vsel %vm147, 1, 0
    %v172 = vsel %vm148, 1, 0
    %v173 = vsel %vm149, 1, 0
    %v174 = vsel %vm150, 1, 0
    %v175 = vcvt.s32.f32 %v151
    %v176 = vcvt.s32.f32 %v152
    %v177 = vcvt.s32.f32 %v153
    %v178 = vcvt.s32.f32 %v154
    %v179 = vcvt.s32.f32 %v155
    %v180 = vcvt.s32.f32 %v156
    %v181 = vcvt.s32.f32 %v157
    %v182 = vcvt.s32.f32 %v158
    %v183 = vcvt.s32.f32 %v159
    %v184 = vcvt.s32.f32 %v160
    %v185 = vcvt.s32.f32 %v161
    %v186 = vcvt.s32.f32 %v162
    %v187 = vcvt.s32.f32 %v163
    %v188 = vcvt.s32.f32 %v164
    %v189 = vcvt.s32.f32 %v165
    %v190 = vcvt.s32.f32 %v166
    %v191 = vcvt.s32.f32 %v167
    %v192 = vcvt.s32.f32 %v168
    %v193 = vcvt.s32.f32 %v169
    %v194 = vcvt.s32.f32 %v170
    %v195 = vcvt.s32.f32 %v171
    %v196 = vcvt.s32.f32 %v172
    %v197 = vcvt.s32.f32 %v173
    %v198 = vcvt.s32.f32 %v174
    %v199 = vld [vmem:[%s1] sm:$0xff]
    %v200 = vld [vmem:[%s1 + $0x8] sm:$0xff]
    %v201 = vld [vmem:[%s1 + $0x10] sm:$0xff]
    %v202 = vld [vmem:[%s1 + $0x18] sm:$0xff]
    %v203 = vld [vmem:[%s1 + $0x20] sm:$0xff]
    %v204 = vld [vmem:[%s1 + $0x28] sm:$0xff]
    %v205 = vld [vmem:[%s1 + $0x30] sm:$0xff]
    %v206 = vld [vmem:[%s1 + $0x38] sm:$0xff]
    %vm207 = vcmask 523264
    %v209 = vsel %vm207, %v175, 0
    %v212 = vsel %vm207, %v176, 0
    %v215 = vsel %vm207, %v177, 0
    %v218 = vsel %vm207, %v178, 0
    %v221 = vsel %vm207, %v179, 0
    %v224 = vsel %vm207, %v180, 0
    %v227 = vsel %vm207, %v181, 0
    %v230 = vsel %vm207, %v182, 0
    %v233 = vsel %vm207, %v183, 0
    %v236 = vsel %vm207, %v184, 0
    %v239 = vsel %vm207, %v185, 0
    %v242 = vsel %vm207, %v186, 0
    %v245 = vsel %vm207, %v187, 0
    %v248 = vsel %vm207, %v188, 0
    %v251 = vsel %vm207, %v189, 0
    %v254 = vsel %vm207, %v190, 0
    %v257 = vsel %vm207, %v191, 0
    %v260 = vsel %vm207, %v192, 0
    %v263 = vsel %vm207, %v193, 0
    %v266 = vsel %vm207, %v194, 0
    %v269 = vsel %vm207, %v195, 0
    %v272 = vsel %vm207, %v196, 0
    %v275 = vsel %vm207, %v197, 0
    %v278 = vsel %vm207, %v198, 0
    %280 = vmatprep.subr.mxu0 0.0
    %281 = vmatpush1.msra.mxu0 %v199
    %282 = vmatprep.subr.mxu0 0.0
    %283 = vmatpush1.msra.mxu0 %v200
    %284 = vmatprep.subr.mxu0 0.0
    %285 = vmatpush1.msra.mxu0 %v201
    %286 = vmatprep.subr.mxu0 0.0
    %287 = vmatpush1.msra.mxu0 %v202
    %288 = vmatprep.subr.mxu0 0.0
    %289 = vmatpush1.msra.mxu0 %v203
    %290 = vmatprep.subr.mxu0 0.0
    %291 = vmatpush1.msra.mxu0 %v204
    %292 = vmatprep.subr.mxu0 0.0
    %293 = vmatpush1.msra.mxu0 %v205
    %294 = vmatprep.subr.mxu0 0.0
    %295 = vmatpush1.msra.mxu0 %v206
    %296 = vmatprep.subr.mxu0 0.0
    %297 = vmatpush1.msra.mxu0 0.0
    %298 = vmatprep.subr.mxu0 0.0
    %299 = vmatpush1.msra.mxu0 0.0
    %300 = vmatprep.subr.mxu0 0.0
    %301 = vmatpush1.msra.mxu0 0.0
    %302 = vmatprep.subr.mxu0 0.0
    %303 = vmatpush1.msra.mxu0 0.0
    %304 = vmatprep.subr.mxu0 0.0
    %305 = vmatpush1.msra.mxu0 0.0
    %306 = vmatprep.subr.mxu0 0.0
    %307 = vmatpush1.msra.mxu0 0.0
    %308 = vmatprep.subr.mxu0 0.0
    %309 = vmatpush1.msra.mxu0 0.0
    %310 = vmatprep.subr.mxu0 0.0
    %311 = vmatpush1.msra.mxu0 0.0
    %312 = vmatprep.subr.mxu0 0.0
    %313 = vmatpush1.msra.mxu0 0.0
    %314 = vmatprep.subr.mxu0 0.0
    %315 = vmatpush1.msra.mxu0 0.0
    %316 = vmatprep.subr.mxu0 0.0
    %317 = vmatpush1.msra.mxu0 0.0
    %318 = vmatprep.subr.mxu0 0.0
    %319 = vmatpush1.msra.mxu0 0.0
    %320 = vmatprep.subr.mxu0 0.0
    %321 = vmatpush1.msra.mxu0 0.0
    %322 = vmatprep.subr.mxu0 0.0
    %323 = vmatpush1.msra.mxu0 0.0
    %324 = vmatprep.subr.mxu0 0.0
    %325 = vmatpush1.msra.mxu0 0.0
    %326 = vmatprep.subr.mxu0 0.0
    %327 = vmatpush1.msra.mxu0 0.0
    %328 = vmatprep.subr.mxu0 0.0
    %329 = vmatpush1.msra.mxu0 0.0
    %330 = vmatprep.subr.mxu0 0.0
    %331 = vmatpush1.msra.mxu0 0.0
    %332 = vmatprep.subr.mxu0 0.0
    %333 = vmatpush1.msra.mxu0 0.0
    %334 = vmatprep.subr.mxu0 0.0
    %335 = vmatpush1.msra.mxu0 0.0
    %336 = vmatprep.subr.mxu0 0.0
    %337 = vmatpush1.msra.mxu0 0.0
    %338 = vmatprep.subr.mxu0 0.0
    %339 = vmatpush1.msra.mxu0 0.0
    %340 = vmatprep.subr.mxu0 0.0
    %341 = vmatpush1.msra.mxu0 0.0
    %342 = vmatprep.subr.mxu0 0.0
    %343 = vmatpush1.msra.mxu0 0.0
    %344 = vmatprep.mubr.f32.mxu0 0.0
    %345 = vmatmul.mubr.f32.gmra.mrb[0].mxu0 %v209
    %v346 = vpop.f32.mrb[0].mxu0
    %v347 = vadd.f32 0.0, %v346
    %v348 = vpop.f32.mrb[0].mxu0
    %349 = vmatprep.mubr.f32.mxu0 0.0
    %350 = vmatmul.mubr.f32.gmra.mrb[0].mxu0 %v212
    %v351 = vpop.f32.mrb[0].mxu0
    %v352 = vadd.f32 0.0, %v351
    %v353 = vpop.f32.mrb[0].mxu0
    %354 = vmatprep.mubr.f32.mxu0 0.0
    %355 = vmatmul.mubr.f32.gmra.mrb[0].mxu0 %v215
    %v356 = vpop.f32.mrb[0].mxu0
    %v357 = vadd.f32 0.0, %v356
    %v358 = vpop.f32.mrb[0].mxu0
    %359 = vmatprep.mubr.f32.mxu0 0.0
    %360 = vmatmul.mubr.f32.gmra.mrb[0].mxu0 %v218
    %v361 = vpop.f32.mrb[0].mxu0
    %v362 = vadd.f32 0.0, %v361
    %v363 = vpop.f32.mrb[0].mxu0
    %364 = vmatprep.mubr.f32.mxu0 0.0
    %365 = vmatmul.mubr.f32.gmra.mrb[0].mxu0 %v221
    %v366 = vpop.f32.mrb[0].mxu0
    %v367 = vadd.f32 0.0, %v366
    %v368 = vpop.f32.mrb[0].mxu0
    %369 = vmatprep.mubr.f32.mxu0 0.0
    %370 = vmatmul.mubr.f32.gmra.mrb[0].mxu0 %v224
    %v371 = vpop.f32.mrb[0].mxu0
    %v372 = vadd.f32 0.0, %v371
    %v373 = vpop.f32.mrb[0].mxu0
    %374 = vmatprep.mubr.f32.mxu0 0.0
    %375 = vmatmul.mubr.f32.gmra.mrb[0].mxu0 %v227
    %v376 = vpop.f32.mrb[0].mxu0
    %v377 = vadd.f32 0.0, %v376
    %v378 = vpop.f32.mrb[0].mxu0
    %379 = vmatprep.mubr.f32.mxu0 0.0
    %380 = vmatmul.mubr.f32.gmra.mrb[0].mxu0 %v230
    %v381 = vpop.f32.mrb[0].mxu0
    %v382 = vadd.f32 0.0, %v381
    %v383 = vpop.f32.mrb[0].mxu0
    %384 = vmatprep.mubr.f32.mxu0 0.0
    %385 = vmatmul.mubr.f32.gmra.mrb[0].mxu0 %v233
    %v386 = vpop.f32.mrb[0].mxu0
    %v387 = vadd.f32 0.0, %v386
    %v388 = vpop.f32.mrb[0].mxu0
    %389 = vmatprep.mubr.f32.mxu0 0.0
    %390 = vmatmul.mubr.f32.gmra.mrb[0].mxu0 %v236
    %v391 = vpop.f32.mrb[0].mxu0
    %v392 = vadd.f32 0.0, %v391
    %v393 = vpop.f32.mrb[0].mxu0
    %394 = vmatprep.mubr.f32.mxu0 0.0
    %395 = vmatmul.mubr.f32.gmra.mrb[0].mxu0 %v239
    %v396 = vpop.f32.mrb[0].mxu0
    %v397 = vadd.f32 0.0, %v396
    %v398 = vpop.f32.mrb[0].mxu0
    %399 = vmatprep.mubr.f32.mxu0 0.0
    %400 = vmatmul.mubr.f32.gmra.mrb[0].mxu0 %v242
    %v401 = vpop.f32.mrb[0].mxu0
    %v402 = vadd.f32 0.0, %v401
    %v403 = vpop.f32.mrb[0].mxu0
    %404 = vmatprep.mubr.f32.mxu0 0.0
    %405 = vmatmul.mubr.f32.gmra.mrb[0].mxu0 %v245
    %v406 = vpop.f32.mrb[0].mxu0
    %v407 = vadd.f32 0.0, %v406
    %v408 = vpop.f32.mrb[0].mxu0
    %409 = vmatprep.mubr.f32.mxu0 0.0
    %410 = vmatmul.mubr.f32.gmra.mrb[0].mxu0 %v248
    %v411 = vpop.f32.mrb[0].mxu0
    %v412 = vadd.f32 0.0, %v411
    %v413 = vpop.f32.mrb[0].mxu0
    %414 = vmatprep.mubr.f32.mxu0 0.0
    %415 = vmatmul.mubr.f32.gmra.mrb[0].mxu0 %v251
    %v416 = vpop.f32.mrb[0].mxu0
    %v417 = vadd.f32 0.0, %v416
    %v418 = vpop.f32.mrb[0].mxu0
    %419 = vmatprep.mubr.f32.mxu0 0.0
    %420 = vmatmul.mubr.f32.gmra.mrb[0].mxu0 %v254
    %v421 = vpop.f32.mrb[0].mxu0
    %v422 = vadd.f32 0.0, %v421
    %v423 = vpop.f32.mrb[0].mxu0
    %424 = vmatprep.mubr.f32.mxu0 0.0
    %425 = vmatmul.mubr.f32.gmra.mrb[0].mxu0 %v257
    %v426 = vpop.f32.mrb[0].mxu0
    %v427 = vadd.f32 0.0, %v426
    %v428 = vpop.f32.mrb[0].mxu0
    %429 = vmatprep.mubr.f32.mxu0 0.0
    %430 = vmatmul.mubr.f32.gmra.mrb[0].mxu0 %v260
    %v431 = vpop.f32.mrb[0].mxu0
    %v432 = vadd.f32 0.0, %v431
    %v433 = vpop.f32.mrb[0].mxu0
    %434 = vmatprep.mubr.f32.mxu0 0.0
    %435 = vmatmul.mubr.f32.gmra.mrb[0].mxu0 %v263
    %v436 = vpop.f32.mrb[0].mxu0
    %v437 = vadd.f32 0.0, %v436
    %v438 = vpop.f32.mrb[0].mxu0
    %439 = vmatprep.mubr.f32.mxu0 0.0
    %440 = vmatmul.mubr.f32.gmra.mrb[0].mxu0 %v266
    %v441 = vpop.f32.mrb[0].mxu0
    %v442 = vadd.f32 0.0, %v441
    %v443 = vpop.f32.mrb[0].mxu0
    %444 = vmatprep.mubr.f32.mxu0 0.0
    %445 = vmatmul.mubr.f32.gmra.mrb[0].mxu0 %v269
    %v446 = vpop.f32.mrb[0].mxu0
    %v447 = vadd.f32 0.0, %v446
    %v448 = vpop.f32.mrb[0].mxu0
    %449 = vmatprep.mubr.f32.mxu0 0.0
    %450 = vmatmul.mubr.f32.gmra.mrb[0].mxu0 %v272
    %v451 = vpop.f32.mrb[0].mxu0
    %v452 = vadd.f32 0.0, %v451
    %v453 = vpop.f32.mrb[0].mxu0
    %454 = vmatprep.mubr.f32.mxu0 0.0
    %455 = vmatmul.mubr.f32.gmra.mrb[0].mxu0 %v275
    %v456 = vpop.f32.mrb[0].mxu0
    %v457 = vadd.f32 0.0, %v456
    %v458 = vpop.f32.mrb[0].mxu0
    %459 = vmatprep.mubr.f32.mxu0 0.0
    %460 = vmatmul.mubr.f32.gmra.mrb[0].mxu0 %v278
    %v461 = vpop.f32.mrb[0].mxu0
    %v462 = vadd.f32 0.0, %v461
    %v463 = vpop.f32.mrb[0].mxu0
    %464 = vdwg.mxu0
    %v465 = vrot.slane %v347, 5
    %v466 = vrot.slane %v352, 5
    %v467 = vrot.slane %v357, 5
    %v468 = vrot.slane %v362, 5
    %v469 = vrot.slane %v367, 5
    %v470 = vrot.slane %v372, 5
    %v471 = vrot.slane %v377, 5
    %v472 = vrot.slane %v382, 5
    %v473 = vrot.slane %v387, 5
    %v474 = vrot.slane %v392, 5
    %v475 = vrot.slane %v397, 5
    %v476 = vrot.slane %v402, 5
    %v477 = vrot.slane %v407, 5
    %v478 = vrot.slane %v412, 5
    %v479 = vrot.slane %v417, 5
    %v480 = vrot.slane %v422, 5
    %v481 = vrot.slane %v427, 5
    %v482 = vrot.slane %v432, 5
    %v483 = vrot.slane %v437, 5
    %v484 = vrot.slane %v442, 5
    %v485 = vrot.slane %v447, 5
    %v486 = vrot.slane %v452, 5
    %v487 = vrot.slane %v457, 5
    %v488 = vrot.slane %v462, 5
    %v489 = vlaneseq
    %v490 = vshrl.u32 %v489, 7
    %vm491 = vcmp.lt.s32.totalorder %v490, 3
    %v492 = vsel %vm491, %v487, %v488
    %v493 = vsel %vm491, %v486, %v487
    %v494 = vsel %vm491, %v485, %v486
    %v495 = vsel %vm491, %v484, %v485
    %v496 = vsel %vm491, %v483, %v484
    %v497 = vsel %vm491, %v482, %v483
    %v498 = vsel %vm491, %v481, %v482
    %v499 = vsel %vm491, %v480, %v481
    %v500 = vsel %vm491, %v479, %v480
    %v501 = vsel %vm491, %v478, %v479
    %v502 = vsel %vm491, %v477, %v478
    %v503 = vsel %vm491, %v476, %v477
    %v504 = vsel %vm491, %v475, %v476
    %v505 = vsel %vm491, %v474, %v475
    %v506 = vsel %vm491, %v473, %v474
    %v507 = vsel %vm491, %v472, %v473
    %v508 = vsel %vm491, %v471, %v472
    %v509 = vsel %vm491, %v470, %v471
    %v510 = vsel %vm491, %v469, %v470
    %v511 = vsel %vm491, %v468, %v469
    %v512 = vsel %vm491, %v467, %v468
    %v513 = vsel %vm491, %v466, %v467
    %v514 = vsel %vm491, %v465, %v466
    %v515 = vsel %vm491, %v488, %v465
    %v516 = vrot.slane %v347, 6
    %v517 = vrot.slane %v352, 6
    %v518 = vrot.slane %v357, 6
    %v519 = vrot.slane %v362, 6
    %v520 = vrot.slane %v367, 6
    %v521 = vrot.slane %v372, 6
    %v522 = vrot.slane %v377, 6
    %v523 = vrot.slane %v382, 6
    %v524 = vrot.slane %v387, 6
    %v525 = vrot.slane %v392, 6
    %v526 = vrot.slane %v397, 6
    %v527 = vrot.slane %v402, 6
    %v528 = vrot.slane %v407, 6
    %v529 = vrot.slane %v412, 6
    %v530 = vrot.slane %v417, 6
    %v531 = vrot.slane %v422, 6
    %v532 = vrot.slane %v427, 6
    %v533 = vrot.slane %v432, 6
    %v534 = vrot.slane %v437, 6
    %v535 = vrot.slane %v442, 6
    %v536 = vrot.slane %v447, 6
    %v537 = vrot.slane %v452, 6
    %v538 = vrot.slane %v457, 6
    %v539 = vrot.slane %v462, 6
    %vm540 = vcmp.lt.s32.totalorder %v490, 2
    %v541 = vsel %vm540, %v538, %v539
    %v542 = vsel %vm540, %v537, %v538
    %v543 = vsel %vm540, %v536, %v537
    %v544 = vsel %vm540, %v535, %v536
    %v545 = vsel %vm540, %v534, %v535
    %v546 = vsel %vm540, %v533, %v534
    %v547 = vsel %vm540, %v532, %v533
    %v548 = vsel %vm540, %v531, %v532
    %v549 = vsel %vm540, %v530, %v531
    %v550 = vsel %vm540, %v529, %v530
    %v551 = vsel %vm540, %v528, %v529
    %v552 = vsel %vm540, %v527, %v528
    %v553 = vsel %vm540, %v526, %v527
    %v554 = vsel %vm540, %v525, %v526
    %v555 = vsel %vm540, %v524, %v525
    %v556 = vsel %vm540, %v523, %v524
    %v557 = vsel %vm540, %v522, %v523
    %v558 = vsel %vm540, %v521, %v522
    %v559 = vsel %vm540, %v520, %v521
    %v560 = vsel %vm540, %v519, %v520
    %v561 = vsel %vm540, %v518, %v519
    %v562 = vsel %vm540, %v517, %v518
    %v563 = vsel %vm540, %v516, %v517
    %v564 = vsel %vm540, %v539, %v516
    %v565 = vrot.slane %v347, 7
    %v566 = vrot.slane %v352, 7
    %v567 = vrot.slane %v357, 7
    %v568 = vrot.slane %v362, 7
    %v569 = vrot.slane %v367, 7
    %v570 = vrot.slane %v372, 7
    %v571 = vrot.slane %v377, 7
    %v572 = vrot.slane %v382, 7
    %v573 = vrot.slane %v387, 7
    %v574 = vrot.slane %v392, 7
    %v575 = vrot.slane %v397, 7
    %v576 = vrot.slane %v402, 7
    %v577 = vrot.slane %v407, 7
    %v578 = vrot.slane %v412, 7
    %v579 = vrot.slane %v417, 7
    %v580 = vrot.slane %v422, 7
    %v581 = vrot.slane %v427, 7
    %v582 = vrot.slane %v432, 7
    %v583 = vrot.slane %v437, 7
    %v584 = vrot.slane %v442, 7
    %v585 = vrot.slane %v447, 7
    %v586 = vrot.slane %v452, 7
    %v587 = vrot.slane %v457, 7
    %v588 = vrot.slane %v462, 7
    %vm589 = vcmp.lt.s32.totalorder %v490, 1
    %v590 = vsel %vm589, %v587, %v588
    %v591 = vsel %vm589, %v586, %v587
    %v592 = vsel %vm589, %v585, %v586
    %v593 = vsel %vm589, %v584, %v585
    %v594 = vsel %vm589, %v583, %v584
    %v595 = vsel %vm589, %v582, %v583
    %v596 = vsel %vm589, %v581, %v582
    %v597 = vsel %vm589, %v580, %v581
    %v598 = vsel %vm589, %v579, %v580
    %v599 = vsel %vm589, %v578, %v579
    %v600 = vsel %vm589, %v577, %v578
    %v601 = vsel %vm589, %v576, %v577
    %v602 = vsel %vm589, %v575, %v576
    %v603 = vsel %vm589, %v574, %v575
    %v604 = vsel %vm589, %v573, %v574
    %v605 = vsel %vm589, %v572, %v573
    %v606 = vsel %vm589, %v571, %v572
    %v607 = vsel %vm589, %v570, %v571
    %v608 = vsel %vm589, %v569, %v570
    %v609 = vsel %vm589, %v568, %v569
    %v610 = vsel %vm589, %v567, %v568
    %v611 = vsel %vm589, %v566, %v567
    %v612 = vsel %vm589, %v565, %v566
    %v613 = vsel %vm589, %v588, %v565
    %638 = vrot.lane.b32.xlu0 %v564, 32
    %v639 = vpop.permute.xlu0 %638
    %640 = vrot.lane.b32.xlu0 %v563, 32
    %v641 = vpop.permute.xlu0 %640
    %642 = vrot.lane.b32.xlu0 %v562, 32
    %v643 = vpop.permute.xlu0 %642
    %644 = vrot.lane.b32.xlu0 %v561, 32
    %v645 = vpop.permute.xlu0 %644
    %646 = vrot.lane.b32.xlu0 %v560, 32
    %v647 = vpop.permute.xlu0 %646
    %648 = vrot.lane.b32.xlu0 %v559, 32
    %v649 = vpop.permute.xlu0 %648
    %650 = vrot.lane.b32.xlu0 %v558, 32
    %v651 = vpop.permute.xlu0 %650
    %652 = vrot.lane.b32.xlu0 %v557, 32
    %v653 = vpop.permute.xlu0 %652
    %654 = vrot.lane.b32.xlu0 %v556, 32
    %v655 = vpop.permute.xlu0 %654
    %656 = vrot.lane.b32.xlu0 %v555, 32
    %v657 = vpop.permute.xlu0 %656
    %658 = vrot.lane.b32.xlu0 %v554, 32
    %v659 = vpop.permute.xlu0 %658
    %660 = vrot.lane.b32.xlu0 %v553, 32
    %v661 = vpop.permute.xlu0 %660
    %662 = vrot.lane.b32.xlu0 %v552, 32
    %v663 = vpop.permute.xlu0 %662
    %664 = vrot.lane.b32.xlu0 %v551, 32
    %v665 = vpop.permute.xlu0 %664
    %666 = vrot.lane.b32.xlu0 %v550, 32
    %v667 = vpop.permute.xlu0 %666
    %668 = vrot.lane.b32.xlu0 %v549, 32
    %v669 = vpop.permute.xlu0 %668
    %670 = vrot.lane.b32.xlu0 %v548, 32
    %v671 = vpop.permute.xlu0 %670
    %672 = vrot.lane.b32.xlu0 %v547, 32
    %v673 = vpop.permute.xlu0 %672
    %674 = vrot.lane.b32.xlu0 %v546, 32
    %v675 = vpop.permute.xlu0 %674
    %676 = vrot.lane.b32.xlu0 %v545, 32
    %v677 = vpop.permute.xlu0 %676
    %678 = vrot.lane.b32.xlu0 %v544, 32
    %v679 = vpop.permute.xlu0 %678
    %680 = vrot.lane.b32.xlu0 %v543, 32
    %v681 = vpop.permute.xlu0 %680
    %682 = vrot.lane.b32.xlu0 %v542, 32
    %v683 = vpop.permute.xlu0 %682
    %684 = vrot.lane.b32.xlu0 %v541, 32
    %v685 = vpop.permute.xlu0 %684
    %734 = vrot.lane.b32.xlu0 %v613, 64
    %v735 = vpop.permute.xlu0 %734
    %736 = vrot.lane.b32.xlu0 %v612, 64
    %v737 = vpop.permute.xlu0 %736
    %738 = vrot.lane.b32.xlu0 %v611, 64
    %v739 = vpop.permute.xlu0 %738
    %740 = vrot.lane.b32.xlu0 %v610, 64
    %v741 = vpop.permute.xlu0 %740
    %742 = vrot.lane.b32.xlu0 %v609, 64
    %v743 = vpop.permute.xlu0 %742
    %744 = vrot.lane.b32.xlu0 %v608, 64
    %v745 = vpop.permute.xlu0 %744
    %746 = vrot.lane.b32.xlu0 %v607, 64
    %v747 = vpop.permute.xlu0 %746
    %748 = vrot.lane.b32.xlu0 %v606, 64
    %v749 = vpop.permute.xlu0 %748
    %750 = vrot.lane.b32.xlu0 %v605, 64
    %v751 = vpop.permute.xlu0 %750
    %752 = vrot.lane.b32.xlu0 %v604, 64
    %v753 = vpop.permute.xlu0 %752
    %754 = vrot.lane.b32.xlu0 %v603, 64
    %v755 = vpop.permute.xlu0 %754
    %756 = vrot.lane.b32.xlu0 %v602, 64
    %v757 = vpop.permute.xlu0 %756
    %758 = vrot.lane.b32.xlu0 %v601, 64
    %v759 = vpop.permute.xlu0 %758
    %760 = vrot.lane.b32.xlu0 %v600, 64
    %v761 = vpop.permute.xlu0 %760
    %762 = vrot.lane.b32.xlu0 %v599, 64
    %v763 = vpop.permute.xlu0 %762
    %764 = vrot.lane.b32.xlu0 %v598, 64
    %v765 = vpop.permute.xlu0 %764
    %766 = vrot.lane.b32.xlu0 %v597, 64
    %v767 = vpop.permute.xlu0 %766
    %768 = vrot.lane.b32.xlu0 %v596, 64
    %v769 = vpop.permute.xlu0 %768
    %770 = vrot.lane.b32.xlu0 %v595, 64
    %v771 = vpop.permute.xlu0 %770
    %772 = vrot.lane.b32.xlu0 %v594, 64
    %v773 = vpop.permute.xlu0 %772
    %774 = vrot.lane.b32.xlu0 %v593, 64
    %v775 = vpop.permute.xlu0 %774
    %776 = vrot.lane.b32.xlu0 %v592, 64
    %v777 = vpop.permute.xlu0 %776
    %778 = vrot.lane.b32.xlu0 %v591, 64
    %v779 = vpop.permute.xlu0 %778
    %780 = vrot.lane.b32.xlu0 %v590, 64
    %v781 = vpop.permute.xlu0 %780
    %830 = vrot.lane.b32.xlu0 %v347, 96
    %v831 = vpop.permute.xlu0 %830
    %832 = vrot.lane.b32.xlu0 %v352, 96
    %v833 = vpop.permute.xlu0 %832
    %834 = vrot.lane.b32.xlu0 %v357, 96
    %v835 = vpop.permute.xlu0 %834
    %836 = vrot.lane.b32.xlu0 %v362, 96
    %v837 = vpop.permute.xlu0 %836
    %838 = vrot.lane.b32.xlu0 %v367, 96
    %v839 = vpop.permute.xlu0 %838
    %840 = vrot.lane.b32.xlu0 %v372, 96
    %v841 = vpop.permute.xlu0 %840
    %842 = vrot.lane.b32.xlu0 %v377, 96
    %v843 = vpop.permute.xlu0 %842
    %844 = vrot.lane.b32.xlu0 %v382, 96
    %v845 = vpop.permute.xlu0 %844
    %846 = vrot.lane.b32.xlu0 %v387, 96
    %v847 = vpop.permute.xlu0 %846
    %848 = vrot.lane.b32.xlu0 %v392, 96
    %v849 = vpop.permute.xlu0 %848
    %850 = vrot.lane.b32.xlu0 %v397, 96
    %v851 = vpop.permute.xlu0 %850
    %852 = vrot.lane.b32.xlu0 %v402, 96
    %v853 = vpop.permute.xlu0 %852
    %854 = vrot.lane.b32.xlu0 %v407, 96
    %v855 = vpop.permute.xlu0 %854
    %856 = vrot.lane.b32.xlu0 %v412, 96
    %v857 = vpop.permute.xlu0 %856
    %858 = vrot.lane.b32.xlu0 %v417, 96
    %v859 = vpop.permute.xlu0 %858
    %860 = vrot.lane.b32.xlu0 %v422, 96
    %v861 = vpop.permute.xlu0 %860
    %862 = vrot.lane.b32.xlu0 %v427, 96
    %v863 = vpop.permute.xlu0 %862
    %864 = vrot.lane.b32.xlu0 %v432, 96
    %v865 = vpop.permute.xlu0 %864
    %866 = vrot.lane.b32.xlu0 %v437, 96
    %v867 = vpop.permute.xlu0 %866
    %868 = vrot.lane.b32.xlu0 %v442, 96
    %v869 = vpop.permute.xlu0 %868
    %870 = vrot.lane.b32.xlu0 %v447, 96
    %v871 = vpop.permute.xlu0 %870
    %872 = vrot.lane.b32.xlu0 %v452, 96
    %v873 = vpop.permute.xlu0 %872
    %874 = vrot.lane.b32.xlu0 %v457, 96
    %v875 = vpop.permute.xlu0 %874
    %876 = vrot.lane.b32.xlu0 %v462, 96
    %v877 = vpop.permute.xlu0 %876
    %vm902 = vcmask 261120
    %v903 = vsel %vm902, %v515, %v639
    %v904 = vsel %vm902, %v514, %v641
    %v905 = vsel %vm902, %v513, %v643
    %v906 = vsel %vm902, %v512, %v645
    %v907 = vsel %vm902, %v511, %v647
    %v908 = vsel %vm902, %v510, %v649
    %v909 = vsel %vm902, %v509, %v651
    %v910 = vsel %vm902, %v508, %v653
    %v911 = vsel %vm902, %v507, %v655
    %v912 = vsel %vm902, %v506, %v657
    %v913 = vsel %vm902, %v505, %v659
    %v914 = vsel %vm902, %v504, %v661
    %v915 = vsel %vm902, %v503, %v663
    %v916 = vsel %vm902, %v502, %v665
    %v917 = vsel %vm902, %v501, %v667
    %v918 = vsel %vm902, %v500, %v669
    %v919 = vsel %vm902, %v499, %v671
    %v920 = vsel %vm902, %v498, %v673
    %v921 = vsel %vm902, %v497, %v675
    %v922 = vsel %vm902, %v496, %v677
    %v923 = vsel %vm902, %v495, %v679
    %v924 = vsel %vm902, %v494, %v681
    %v925 = vsel %vm902, %v493, %v683
    %v926 = vsel %vm902, %v492, %v685
    %v927 = vsel %vm207, %v903, %v735
    %v928 = vsel %vm207, %v904, %v737
    %v929 = vsel %vm207, %v905, %v739
    %v930 = vsel %vm207, %v906, %v741
    %v931 = vsel %vm207, %v907, %v743
    %v932 = vsel %vm207, %v908, %v745
    %v933 = vsel %vm207, %v909, %v747
    %v934 = vsel %vm207, %v910, %v749
    %v935 = vsel %vm207, %v911, %v751
    %v936 = vsel %vm207, %v912, %v753
    %v937 = vsel %vm207, %v913, %v755
    %v938 = vsel %vm207, %v914, %v757
    %v939 = vsel %vm207, %v915, %v759
    %v940 = vsel %vm207, %v916, %v761
    %v941 = vsel %vm207, %v917, %v763
    %v942 = vsel %vm207, %v918, %v765
    %v943 = vsel %vm207, %v919, %v767
    %v944 = vsel %vm207, %v920, %v769
    %v945 = vsel %vm207, %v921, %v771
    %v946 = vsel %vm207, %v922, %v773
    %v947 = vsel %vm207, %v923, %v775
    %v948 = vsel %vm207, %v924, %v777
    %v949 = vsel %vm207, %v925, %v779
    %v950 = vsel %vm207, %v926, %v781
    %vm951 = vcmask 785408
    %v952 = vsel %vm951, %v927, %v831
    %v953 = vsel %vm951, %v928, %v833
    %v954 = vsel %vm951, %v929, %v835
    %v955 = vsel %vm951, %v930, %v837
    %v956 = vsel %vm951, %v931, %v839
    %v957 = vsel %vm951, %v932, %v841
    %v958 = vsel %vm951, %v933, %v843
    %v959 = vsel %vm951, %v934, %v845
    %v960 = vsel %vm951, %v935, %v847
    %v961 = vsel %vm951, %v936, %v849
    %v962 = vsel %vm951, %v937, %v851
    %v963 = vsel %vm951, %v938, %v853
    %v964 = vsel %vm951, %v939, %v855
    %v965 = vsel %vm951, %v940, %v857
    %v966 = vsel %vm951, %v941, %v859
    %v967 = vsel %vm951, %v942, %v861
    %v968 = vsel %vm951, %v943, %v863
    %v969 = vsel %vm951, %v944, %v865
    %v970 = vsel %vm951, %v945, %v867
    %v971 = vsel %vm951, %v946, %v869
    %v972 = vsel %vm951, %v947, %v871
    %v973 = vsel %vm951, %v948, %v873
    %v974 = vsel %vm951, %v949, %v875
    %v975 = vsel %vm951, %v950, %v877
    %v976 = vld [vmem:[#allocation2] sm:$0xff]
    %v977 = vld [vmem:[#allocation2 + $0x8] sm:$0xff]
    %v978 = vld [vmem:[#allocation2 + $0x10] sm:$0xff]
    %v979 = vld [vmem:[#allocation2 + $0x18] sm:$0xff]
    %v980 = vld [vmem:[#allocation2 + $0x20] sm:$0xff]
    %v981 = vld [vmem:[#allocation2 + $0x28] sm:$0xff]
    %v982 = vld [vmem:[#allocation2 + $0x30] sm:$0xff]
    %v983 = vld [vmem:[#allocation2 + $0x38] sm:$0xff]
    %v984 = vld [vmem:[#allocation2 + $0x40] sm:$0xff]
    %v985 = vld [vmem:[#allocation2 + $0x48] sm:$0xff]
    %v986 = vld [vmem:[#allocation2 + $0x50] sm:$0xff]
    %v987 = vld [vmem:[#allocation2 + $0x58] sm:$0xff]
    %v988 = vld [vmem:[#allocation2 + $0x60] sm:$0xff]
    %v989 = vld [vmem:[#allocation2 + $0x68] sm:$0xff]
    %v990 = vld [vmem:[#allocation2 + $0x70] sm:$0xff]
    %v991 = vld [vmem:[#allocation2 + $0x78] sm:$0xff]
    %992 = vmatprep.subr.mxu0 0.0
    %993 = vmatpush1.msra.mxu0 %v976
    %994 = vmatprep.subr.mxu0 0.0
    %995 = vmatpush1.msra.mxu0 %v977
    %996 = vmatprep.subr.mxu0 0.0
    %997 = vmatpush1.msra.mxu0 %v978
    %998 = vmatprep.subr.mxu0 0.0
    %999 = vmatpush1.msra.mxu0 %v979
    %1000 = vmatprep.subr.mxu0 0.0
    %1001 = vmatpush1.msra.mxu0 %v980
    %1002 = vmatprep.subr.mxu0 0.0
    %1003 = vmatpush1.msra.mxu0 %v981
    %1004 = vmatprep.subr.mxu0 0.0
    %1005 = vmatpush1.msra.mxu0 %v982
    %1006 = vmatprep.subr.mxu0 0.0
    %1007 = vmatpush1.msra.mxu0 %v983
    %1008 = vmatprep.subr.mxu0 0.0
    %1009 = vmatpush1.msra.mxu0 %v984
    %1010 = vmatprep.subr.mxu0 0.0
    %1011 = vmatpush1.msra.mxu0 %v985
    %1012 = vmatprep.subr.mxu0 0.0
    %1013 = vmatpush1.msra.mxu0 %v986
    %1014 = vmatprep.subr.mxu0 0.0
    %1015 = vmatpush1.msra.mxu0 %v987
    %1016 = vmatprep.subr.mxu0 0.0
    %1017 = vmatpush1.msra.mxu0 %v988
    %1018 = vmatprep.subr.mxu0 0.0
    %1019 = vmatpush1.msra.mxu0 %v989
    %1020 = vmatprep.subr.mxu0 0.0
    %1021 = vmatpush1.msra.mxu0 %v990
    %1022 = vmatprep.subr.mxu0 0.0
    %1023 = vmatpush1.msra.mxu0 %v991
    %1024 = vmatprep.subr.mxu0 0.0
    %1025 = vmatpush1.msra.mxu0 0.0
    %1026 = vmatprep.subr.mxu0 0.0
    %1027 = vmatpush1.msra.mxu0 0.0
    %1028 = vmatprep.subr.mxu0 0.0
    %1029 = vmatpush1.msra.mxu0 0.0
    %1030 = vmatprep.subr.mxu0 0.0
    %1031 = vmatpush1.msra.mxu0 0.0
    %1032 = vmatprep.subr.mxu0 0.0
    %1033 = vmatpush1.msra.mxu0 0.0
    %1034 = vmatprep.subr.mxu0 0.0
    %1035 = vmatpush1.msra.mxu0 0.0
    %1036 = vmatprep.subr.mxu0 0.0
    %1037 = vmatpush1.msra.mxu0 0.0
    %1038 = vmatprep.subr.mxu0 0.0
    %1039 = vmatpush1.msra.mxu0 0.0
    %1040 = vmatprep.subr.mxu0 0.0
    %1041 = vmatpush1.msra.mxu0 0.0
    %1042 = vmatprep.subr.mxu0 0.0
    %1043 = vmatpush1.msra.mxu0 0.0
    %1044 = vmatprep.subr.mxu0 0.0
    %1045 = vmatpush1.msra.mxu0 0.0
    %1046 = vmatprep.subr.mxu0 0.0
    %1047 = vmatpush1.msra.mxu0 0.0
    %1048 = vmatprep.subr.mxu0 0.0
    %1049 = vmatpush1.msra.mxu0 0.0
    %1050 = vmatprep.subr.mxu0 0.0
    %1051 = vmatpush1.msra.mxu0 0.0
    %1052 = vmatprep.subr.mxu0 0.0
    %1053 = vmatpush1.msra.mxu0 0.0
    %1054 = vmatprep.subr.mxu0 0.0
    %1055 = vmatpush1.msra.mxu0 0.0
    %1056 = vmatprep.mubr.f32.mxu0 0.0
    %1057 = vmatmul.mubr.f32.gmra.mrb[0].mxu0 %v952
    %v1058 = vpop.f32.mrb[0].mxu0
    %v1059 = vadd.f32 0.0, %v1058
    %v1060 = vpop.f32.mrb[0].mxu0
    %1061 = vmatprep.mubr.f32.mxu0 0.0
    %1062 = vmatmul.mubr.f32.gmra.mrb[0].mxu0 %v953
    %v1063 = vpop.f32.mrb[0].mxu0
    %v1064 = vadd.f32 0.0, %v1063
    %v1065 = vpop.f32.mrb[0].mxu0
    %1066 = vmatprep.mubr.f32.mxu0 0.0
    %1067 = vmatmul.mubr.f32.gmra.mrb[0].mxu0 %v954
    %v1068 = vpop.f32.mrb[0].mxu0
    %v1069 = vadd.f32 0.0, %v1068
    %v1070 = vpop.f32.mrb[0].mxu0
    %1071 = vmatprep.mubr.f32.mxu0 0.0
    %1072 = vmatmul.mubr.f32.gmra.mrb[0].mxu0 %v955
    %v1073 = vpop.f32.mrb[0].mxu0
    %v1074 = vadd.f32 0.0, %v1073
    %v1075 = vpop.f32.mrb[0].mxu0
    %1076 = vmatprep.mubr.f32.mxu0 0.0
    %1077 = vmatmul.mubr.f32.gmra.mrb[0].mxu0 %v956
    %v1078 = vpop.f32.mrb[0].mxu0
    %v1079 = vadd.f32 0.0, %v1078
    %v1080 = vpop.f32.mrb[0].mxu0
    %1081 = vmatprep.mubr.f32.mxu0 0.0
    %1082 = vmatmul.mubr.f32.gmra.mrb[0].mxu0 %v957
    %v1083 = vpop.f32.mrb[0].mxu0
    %v1084 = vadd.f32 0.0, %v1083
    %v1085 = vpop.f32.mrb[0].mxu0
    %1086 = vmatprep.mubr.f32.mxu0 0.0
    %1087 = vmatmul.mubr.f32.gmra.mrb[0].mxu0 %v958
    %v1088 = vpop.f32.mrb[0].mxu0
    %v1089 = vadd.f32 0.0, %v1088
    %v1090 = vpop.f32.mrb[0].mxu0
    %1091 = vmatprep.mubr.f32.mxu0 0.0
    %1092 = vmatmul.mubr.f32.gmra.mrb[0].mxu0 %v959
    %v1093 = vpop.f32.mrb[0].mxu0
    %v1094 = vadd.f32 0.0, %v1093
    %v1095 = vpop.f32.mrb[0].mxu0
    %1096 = vmatprep.mubr.f32.mxu0 0.0
    %1097 = vmatmul.mubr.f32.gmra.mrb[0].mxu0 %v960
    %v1098 = vpop.f32.mrb[0].mxu0
    %v1099 = vadd.f32 0.0, %v1098
    %v1100 = vpop.f32.mrb[0].mxu0
    %1101 = vmatprep.mubr.f32.mxu0 0.0
    %1102 = vmatmul.mubr.f32.gmra.mrb[0].mxu0 %v961
    %v1103 = vpop.f32.mrb[0].mxu0
    %v1104 = vadd.f32 0.0, %v1103
    %v1105 = vpop.f32.mrb[0].mxu0
    %1106 = vmatprep.mubr.f32.mxu0 0.0
    %1107 = vmatmul.mubr.f32.gmra.mrb[0].mxu0 %v962
    %v1108 = vpop.f32.mrb[0].mxu0
    %v1109 = vadd.f32 0.0, %v1108
    %v1110 = vpop.f32.mrb[0].mxu0
    %1111 = vmatprep.mubr.f32.mxu0 0.0
    %1112 = vmatmul.mubr.f32.gmra.mrb[0].mxu0 %v963
    %v1113 = vpop.f32.mrb[0].mxu0
    %v1114 = vadd.f32 0.0, %v1113
    %v1115 = vpop.f32.mrb[0].mxu0
    %1116 = vmatprep.mubr.f32.mxu0 0.0
    %1117 = vmatmul.mubr.f32.gmra.mrb[0].mxu0 %v964
    %v1118 = vpop.f32.mrb[0].mxu0
    %v1119 = vadd.f32 0.0, %v1118
    %v1120 = vpop.f32.mrb[0].mxu0
    %1121 = vmatprep.mubr.f32.mxu0 0.0
    %1122 = vmatmul.mubr.f32.gmra.mrb[0].mxu0 %v965
    %v1123 = vpop.f32.mrb[0].mxu0
    %v1124 = vadd.f32 0.0, %v1123
    %v1125 = vpop.f32.mrb[0].mxu0
    %1126 = vmatprep.mubr.f32.mxu0 0.0
    %1127 = vmatmul.mubr.f32.gmra.mrb[0].mxu0 %v966
    %v1128 = vpop.f32.mrb[0].mxu0
    %v1129 = vadd.f32 0.0, %v1128
    %v1130 = vpop.f32.mrb[0].mxu0
    %1131 = vmatprep.mubr.f32.mxu0 0.0
    %1132 = vmatmul.mubr.f32.gmra.mrb[0].mxu0 %v967
    %v1133 = vpop.f32.mrb[0].mxu0
    %v1134 = vadd.f32 0.0, %v1133
    %v1135 = vpop.f32.mrb[0].mxu0
    %1136 = vmatprep.mubr.f32.mxu0 0.0
    %1137 = vmatmul.mubr.f32.gmra.mrb[0].mxu0 %v968
    %v1138 = vpop.f32.mrb[0].mxu0
    %v1139 = vadd.f32 0.0, %v1138
    %v1140 = vpop.f32.mrb[0].mxu0
    %1141 = vmatprep.mubr.f32.mxu0 0.0
    %1142 = vmatmul.mubr.f32.gmra.mrb[0].mxu0 %v969
    %v1143 = vpop.f32.mrb[0].mxu0
    %v1144 = vadd.f32 0.0, %v1143
    %v1145 = vpop.f32.mrb[0].mxu0
    %1146 = vmatprep.mubr.f32.mxu0 0.0
    %1147 = vmatmul.mubr.f32.gmra.mrb[0].mxu0 %v970
    %v1148 = vpop.f32.mrb[0].mxu0
    %v1149 = vadd.f32 0.0, %v1148
    %v1150 = vpop.f32.mrb[0].mxu0
    %1151 = vmatprep.mubr.f32.mxu0 0.0
    %1152 = vmatmul.mubr.f32.gmra.mrb[0].mxu0 %v971
    %v1153 = vpop.f32.mrb[0].mxu0
    %v1154 = vadd.f32 0.0, %v1153
    %v1155 = vpop.f32.mrb[0].mxu0
    %1156 = vmatprep.mubr.f32.mxu0 0.0
    %1157 = vmatmul.mubr.f32.gmra.mrb[0].mxu0 %v972
    %v1158 = vpop.f32.mrb[0].mxu0
    %v1159 = vadd.f32 0.0, %v1158
    %v1160 = vpop.f32.mrb[0].mxu0
    %1161 = vmatprep.mubr.f32.mxu0 0.0
    %1162 = vmatmul.mubr.f32.gmra.mrb[0].mxu0 %v973
    %v1163 = vpop.f32.mrb[0].mxu0
    %v1164 = vadd.f32 0.0, %v1163
    %v1165 = vpop.f32.mrb[0].mxu0
    %1166 = vmatprep.mubr.f32.mxu0 0.0
    %1167 = vmatmul.mubr.f32.gmra.mrb[0].mxu0 %v974
    %v1168 = vpop.f32.mrb[0].mxu0
    %v1169 = vadd.f32 0.0, %v1168
    %v1170 = vpop.f32.mrb[0].mxu0
    %1171 = vmatprep.mubr.f32.mxu0 0.0
    %1172 = vmatmul.mubr.f32.gmra.mrb[0].mxu0 %v975
    %v1173 = vpop.f32.mrb[0].mxu0
    %v1174 = vadd.f32 0.0, %v1173
    %v1175 = vpop.f32.mrb[0].mxu0
    %1176 = vdwg.mxu0
    %v1177 = vld [vmem:[#allocation2 + $0x80] sm:$0xff]
    %v1178 = vld [vmem:[#allocation2 + $0x88] sm:$0xff]
    %v1179 = vld [vmem:[#allocation2 + $0x90] sm:$0xff]
    %v1180 = vadd.f32 %v1059, %v1177
    %v1181 = vadd.f32 %v1064, %v1178
    %v1182 = vadd.f32 %v1069, %v1179
    %v1183 = vadd.f32 %v1074, %v1177
    %v1184 = vadd.f32 %v1079, %v1178
    %v1185 = vadd.f32 %v1084, %v1179
    %v1186 = vadd.f32 %v1089, %v1177
    %v1187 = vadd.f32 %v1094, %v1178
    %v1188 = vadd.f32 %v1099, %v1179
    %v1189 = vadd.f32 %v1104, %v1177
    %v1190 = vadd.f32 %v1109, %v1178
    %v1191 = vadd.f32 %v1114, %v1179
    %v1192 = vadd.f32 %v1119, %v1177
    %v1193 = vadd.f32 %v1124, %v1178
    %v1194 = vadd.f32 %v1129, %v1179
    %v1195 = vadd.f32 %v1134, %v1177
    %v1196 = vadd.f32 %v1139, %v1178
    %v1197 = vadd.f32 %v1144, %v1179
    %v1198 = vadd.f32 %v1149, %v1177
    %v1199 = vadd.f32 %v1154, %v1178
    %v1200 = vadd.f32 %v1159, %v1179
    %v1201 = vadd.f32 %v1164, %v1177
    %v1202 = vadd.f32 %v1169, %v1178
    %v1203 = vadd.f32 %v1174, %v1179
    %v1204 = vtanh.pop %v1180
    %v1205 = vtanh.pop %v1181
    %v1206 = vtanh.pop %v1182
    %v1207 = vtanh.pop %v1183
    %v1208 = vtanh.pop %v1184
    %v1209 = vtanh.pop %v1185
    %v1210 = vtanh.pop %v1186
    %v1211 = vtanh.pop %v1187
    %v1212 = vtanh.pop %v1188
    %v1213 = vtanh.pop %v1189
    %v1214 = vtanh.pop %v1190
    %v1215 = vtanh.pop %v1191
    %v1216 = vtanh.pop %v1192
    %v1217 = vtanh.pop %v1193
    %v1218 = vtanh.pop %v1194
    %v1219 = vtanh.pop %v1195
    %v1220 = vtanh.pop %v1196
    %v1221 = vtanh.pop %v1197
    %v1222 = vtanh.pop %v1198
    %v1223 = vtanh.pop %v1199
    %v1224 = vtanh.pop %v1200
    %v1225 = vtanh.pop %v1201
    %v1226 = vtanh.pop %v1202
    %v1227 = vtanh.pop %v1203
    %v1228 = vmax.f32 %v1204, %v1205
    %v1229 = vmax.f32 %v1228, %v1206
    %v1230 = vrot.slane %v1229, 4
    %v1231 = vmax.f32 %v1229, %v1230
    %v1232 = vrot.slane %v1231, 2
    %v1233 = vmax.f32 %v1231, %v1232
    %v1234 = vrot.slane %v1233, 1
    %v1235 = vmax.f32 %v1233, %v1234
    %v1236 = vmax.f32 %v1207, %v1208
    %v1237 = vmax.f32 %v1236, %v1209
    %v1238 = vrot.slane %v1237, 4
    %v1239 = vmax.f32 %v1237, %v1238
    %v1240 = vrot.slane %v1239, 2
    %v1241 = vmax.f32 %v1239, %v1240
    %v1242 = vrot.slane %v1241, 1
    %v1243 = vmax.f32 %v1241, %v1242
    %v1244 = vmax.f32 %v1210, %v1211
    %v1245 = vmax.f32 %v1244, %v1212
    %v1246 = vrot.slane %v1245, 4
    %v1247 = vmax.f32 %v1245, %v1246
    %v1248 = vrot.slane %v1247, 2
    %v1249 = vmax.f32 %v1247, %v1248
    %v1250 = vrot.slane %v1249, 1
    %v1251 = vmax.f32 %v1249, %v1250
    %v1252 = vmax.f32 %v1213, %v1214
    %v1253 = vmax.f32 %v1252, %v1215
    %v1254 = vrot.slane %v1253, 4
    %v1255 = vmax.f32 %v1253, %v1254
    %v1256 = vrot.slane %v1255, 2
    %v1257 = vmax.f32 %v1255, %v1256
    %v1258 = vrot.slane %v1257, 1
    %v1259 = vmax.f32 %v1257, %v1258
    %v1260 = vmax.f32 %v1216, %v1217
    %v1261 = vmax.f32 %v1260, %v1218
    %v1262 = vrot.slane %v1261, 4
    %v1263 = vmax.f32 %v1261, %v1262
    %v1264 = vrot.slane %v1263, 2
    %v1265 = vmax.f32 %v1263, %v1264
    %v1266 = vrot.slane %v1265, 1
    %v1267 = vmax.f32 %v1265, %v1266
    %v1268 = vmax.f32 %v1219, %v1220
    %v1269 = vmax.f32 %v1268, %v1221
    %v1270 = vrot.slane %v1269, 4
    %v1271 = vmax.f32 %v1269, %v1270
    %v1272 = vrot.slane %v1271, 2
    %v1273 = vmax.f32 %v1271, %v1272
    %v1274 = vrot.slane %v1273, 1
    %v1275 = vmax.f32 %v1273, %v1274
    %v1276 = vmax.f32 %v1222, %v1223
    %v1277 = vmax.f32 %v1276, %v1224
    %v1278 = vrot.slane %v1277, 4
    %v1279 = vmax.f32 %v1277, %v1278
    %v1280 = vrot.slane %v1279, 2
    %v1281 = vmax.f32 %v1279, %v1280
    %v1282 = vrot.slane %v1281, 1
    %v1283 = vmax.f32 %v1281, %v1282
    %v1284 = vmax.f32 %v1225, %v1226
    %v1285 = vmax.f32 %v1284, %v1227
    %v1286 = vrot.slane %v1285, 4
    %v1287 = vmax.f32 %v1285, %v1286
    %v1288 = vrot.slane %v1287, 2
    %v1289 = vmax.f32 %v1287, %v1288
    %v1290 = vrot.slane %v1289, 1
    %v1291 = vmax.f32 %v1289, %v1290
    %v1292 = vld [vmem:[#allocation2 + $0x298] sm:$0xff]
    %v1293 = vld [vmem:[#allocation2 + $0x98] sm:$0xff]
    %v1294 = vld [vmem:[#allocation2 + $0xa0] sm:$0xff]
    %v1295 = vld [vmem:[#allocation2 + $0xa8] sm:$0xff]
    %v1296 = vld [vmem:[#allocation2 + $0xb0] sm:$0xff]
    %v1297 = vld [vmem:[#allocation2 + $0xb8] sm:$0xff]
    %v1298 = vld [vmem:[#allocation2 + $0xc0] sm:$0xff]
    %v1299 = vld [vmem:[#allocation2 + $0xc8] sm:$0xff]
    %v1300 = vld [vmem:[#allocation2 + $0xd0] sm:$0xff]
    %v1301 = vld [vmem:[#allocation2 + $0xd8] sm:$0xff]
    %v1302 = vld [vmem:[#allocation2 + $0xe0] sm:$0xff]
    %v1303 = vld [vmem:[#allocation2 + $0xe8] sm:$0xff]
    %v1304 = vld [vmem:[#allocation2 + $0xf0] sm:$0xff]
    %v1305 = vld [vmem:[#allocation2 + $0xf8] sm:$0xff]
    %v1306 = vld [vmem:[#allocation2 + $0x100] sm:$0xff]
    %v1307 = vld [vmem:[#allocation2 + $0x108] sm:$0xff]
    %v1308 = vld [vmem:[#allocation2 + $0x110] sm:$0xff]
    %vm1317 = vcmask 1041409
    %v1318 = vsel %vm1317, %v1243, %v1235
    %vm1319 = vcmask 1042434
    %v1320 = vsel %vm1319, %v1251, %v1318
    %vm1321 = vcmask 1043459
    %v1322 = vsel %vm1321, %v1259, %v1320
    %vm1323 = vcmask 1044484
    %v1324 = vsel %vm1323, %v1267, %v1322
    %vm1325 = vcmask 1045509
    %v1326 = vsel %vm1325, %v1275, %v1324
    %vm1327 = vcmask 1046534
    %v1328 = vsel %vm1327, %v1283, %v1326
    %vm1329 = vcmask 1047559
    %v1330 = vsel %vm1329, %v1291, %v1328
    %1332 = vmatprep.subr.mxu0 0.0
    %1333 = vmatpush1.msra.mxu0 %v1293
    %1334 = vmatprep.subr.mxu0 0.0
    %1335 = vmatpush1.msra.mxu0 %v1294
    %1336 = vmatprep.subr.mxu0 0.0
    %1337 = vmatpush1.msra.mxu0 %v1295
    %1338 = vmatprep.subr.mxu0 0.0
    %1339 = vmatpush1.msra.mxu0 %v1296
    %1340 = vmatprep.subr.mxu0 0.0
    %1341 = vmatpush1.msra.mxu0 %v1297
    %1342 = vmatprep.subr.mxu0 0.0
    %1343 = vmatpush1.msra.mxu0 %v1298
    %1344 = vmatprep.subr.mxu0 0.0
    %1345 = vmatpush1.msra.mxu0 %v1299
    %1346 = vmatprep.subr.mxu0 0.0
    %1347 = vmatpush1.msra.mxu0 %v1300
    %1348 = vmatprep.subr.mxu0 0.0
    %1349 = vmatpush1.msra.mxu0 %v1301
    %1350 = vmatprep.subr.mxu0 0.0
    %1351 = vmatpush1.msra.mxu0 %v1302
    %1352 = vmatprep.subr.mxu0 0.0
    %1353 = vmatpush1.msra.mxu0 %v1303
    %1354 = vmatprep.subr.mxu0 0.0
    %1355 = vmatpush1.msra.mxu0 %v1304
    %1356 = vmatprep.subr.mxu0 0.0
    %1357 = vmatpush1.msra.mxu0 %v1305
    %1358 = vmatprep.subr.mxu0 0.0
    %1359 = vmatpush1.msra.mxu0 %v1306
    %1360 = vmatprep.subr.mxu0 0.0
    %1361 = vmatpush1.msra.mxu0 %v1307
    %1362 = vmatprep.subr.mxu0 0.0
    %1363 = vmatpush1.msra.mxu0 %v1308
    %1364 = vmatprep.subr.mxu0 0.0
    %1365 = vmatpush1.msra.mxu0 0.0
    %1366 = vmatprep.subr.mxu0 0.0
    %1367 = vmatpush1.msra.mxu0 0.0
    %1368 = vmatprep.subr.mxu0 0.0
    %1369 = vmatpush1.msra.mxu0 0.0
    %1370 = vmatprep.subr.mxu0 0.0
    %1371 = vmatpush1.msra.mxu0 0.0
    %1372 = vmatprep.subr.mxu0 0.0
    %1373 = vmatpush1.msra.mxu0 0.0
    %1374 = vmatprep.subr.mxu0 0.0
    %1375 = vmatpush1.msra.mxu0 0.0
    %1376 = vmatprep.subr.mxu0 0.0
    %1377 = vmatpush1.msra.mxu0 0.0
    %1378 = vmatprep.subr.mxu0 0.0
    %1379 = vmatpush1.msra.mxu0 0.0
    %1380 = vmatprep.subr.mxu0 0.0
    %1381 = vmatpush1.msra.mxu0 0.0
    %1382 = vmatprep.subr.mxu0 0.0
    %1383 = vmatpush1.msra.mxu0 0.0
    %1384 = vmatprep.subr.mxu0 0.0
    %1385 = vmatpush1.msra.mxu0 0.0
    %1386 = vmatprep.subr.mxu0 0.0
    %1387 = vmatpush1.msra.mxu0 0.0
    %1388 = vmatprep.subr.mxu0 0.0
    %1389 = vmatpush1.msra.mxu0 0.0
    %1390 = vmatprep.subr.mxu0 0.0
    %1391 = vmatpush1.msra.mxu0 0.0
    %1392 = vmatprep.subr.mxu0 0.0
    %1393 = vmatpush1.msra.mxu0 0.0
    %1394 = vmatprep.subr.mxu0 0.0
    %1395 = vmatpush1.msra.mxu0 0.0
    %1396 = vmatprep.mubr.f32.mxu0 0.0
    %1397 = vmatmul.mubr.f32.gmra.mrb[0].mxu0 %v1330
    %v1398 = vpop.f32.mrb[0].mxu0
    %v1399 = vadd.f32 0.0, %v1398
    %v1400 = vpop.f32.mrb[0].mxu0
    %1401 = vdwg.mxu0
    %v1402 = vlaneseq
    %v1403 = vshrl.u32 %v1402, 7
    %v1404 = vsub.s32 0, %v1403
    %v1405 = vrot.slane %v1292, %v1404
    %v1406 = vmul.f32 %v1399, %v1405
    %v1407 = vlaneseq
    %v1408 = vshrl.u32 %v1407, 7
    %v1409 = vsub.s32 1, %v1408
    %v1410 = vrot.slane %v1292, %v1409
    %v1411 = vadd.f32 %v1406, %v1410
    %v1412 = vmax.f32 %v1411, 0.0
    %v1413 = vld [vmem:[#allocation2 + $0x118] sm:$0xff]
    %v1414 = vld [vmem:[#allocation2 + $0x120] sm:$0xff]
    %v1415 = vld [vmem:[#allocation2 + $0x128] sm:$0xff]
    %v1416 = vld [vmem:[#allocation2 + $0x130] sm:$0xff]
    %v1417 = vld [vmem:[#allocation2 + $0x138] sm:$0xff]
    %v1418 = vld [vmem:[#allocation2 + $0x140] sm:$0xff]
    %v1419 = vld [vmem:[#allocation2 + $0x148] sm:$0xff]
    %v1420 = vld [vmem:[#allocation2 + $0x150] sm:$0xff]
    %v1421 = vld [vmem:[#allocation2 + $0x158] sm:$0xff]
    %v1422 = vld [vmem:[#allocation2 + $0x160] sm:$0xff]
    %v1423 = vld [vmem:[#allocation2 + $0x168] sm:$0xff]
    %v1424 = vld [vmem:[#allocation2 + $0x170] sm:$0xff]
    %v1425 = vld [vmem:[#allocation2 + $0x178] sm:$0xff]
    %v1426 = vld [vmem:[#allocation2 + $0x180] sm:$0xff]
    %v1427 = vld [vmem:[#allocation2 + $0x188] sm:$0xff]
    %v1428 = vld [vmem:[#allocation2 + $0x190] sm:$0xff]
    %1429 = vmatprep.subr.mxu0 0.0
    %1430 = vmatpush1.msra.mxu0 %v1413
    %1431 = vmatprep.subr.mxu0 0.0
    %1432 = vmatpush1.msra.mxu0 %v1414
    %1433 = vmatprep.subr.mxu0 0.0
    %1434 = vmatpush1.msra.mxu0 %v1415
    %1435 = vmatprep.subr.mxu0 0.0
    %1436 = vmatpush1.msra.mxu0 %v1416
    %1437 = vmatprep.subr.mxu0 0.0
    %1438 = vmatpush1.msra.mxu0 %v1417
    %1439 = vmatprep.subr.mxu0 0.0
    %1440 = vmatpush1.msra.mxu0 %v1418
    %1441 = vmatprep.subr.mxu0 0.0
    %1442 = vmatpush1.msra.mxu0 %v1419
    %1443 = vmatprep.subr.mxu0 0.0
    %1444 = vmatpush1.msra.mxu0 %v1420
    %1445 = vmatprep.subr.mxu0 0.0
    %1446 = vmatpush1.msra.mxu0 %v1421
    %1447 = vmatprep.subr.mxu0 0.0
    %1448 = vmatpush1.msra.mxu0 %v1422
    %1449 = vmatprep.subr.mxu0 0.0
    %1450 = vmatpush1.msra.mxu0 %v1423
    %1451 = vmatprep.subr.mxu0 0.0
    %1452 = vmatpush1.msra.mxu0 %v1424
    %1453 = vmatprep.subr.mxu0 0.0
    %1454 = vmatpush1.msra.mxu0 %v1425
    %1455 = vmatprep.subr.mxu0 0.0
    %1456 = vmatpush1.msra.mxu0 %v1426
    %1457 = vmatprep.subr.mxu0 0.0
    %1458 = vmatpush1.msra.mxu0 %v1427
    %1459 = vmatprep.subr.mxu0 0.0
    %1460 = vmatpush1.msra.mxu0 %v1428
    %1461 = vmatprep.subr.mxu0 0.0
    %1462 = vmatpush1.msra.mxu0 0.0
    %1463 = vmatprep.subr.mxu0 0.0
    %1464 = vmatpush1.msra.mxu0 0.0
    %1465 = vmatprep.subr.mxu0 0.0
    %1466 = vmatpush1.msra.mxu0 0.0
    %1467 = vmatprep.subr.mxu0 0.0
    %1468 = vmatpush1.msra.mxu0 0.0
    %1469 = vmatprep.subr.mxu0 0.0
    %1470 = vmatpush1.msra.mxu0 0.0
    %1471 = vmatprep.subr.mxu0 0.0
    %1472 = vmatpush1.msra.mxu0 0.0
    %1473 = vmatprep.subr.mxu0 0.0
    %1474 = vmatpush1.msra.mxu0 0.0
    %1475 = vmatprep.subr.mxu0 0.0
    %1476 = vmatpush1.msra.mxu0 0.0
    %1477 = vmatprep.subr.mxu0 0.0
    %1478 = vmatpush1.msra.mxu0 0.0
    %1479 = vmatprep.subr.mxu0 0.0
    %1480 = vmatpush1.msra.mxu0 0.0
    %1481 = vmatprep.subr.mxu0 0.0
    %1482 = vmatpush1.msra.mxu0 0.0
    %1483 = vmatprep.subr.mxu0 0.0
    %1484 = vmatpush1.msra.mxu0 0.0
    %1485 = vmatprep.subr.mxu0 0.0
    %1486 = vmatpush1.msra.mxu0 0.0
    %1487 = vmatprep.subr.mxu0 0.0
    %1488 = vmatpush1.msra.mxu0 0.0
    %1489 = vmatprep.subr.mxu0 0.0
    %1490 = vmatpush1.msra.mxu0 0.0
    %1491 = vmatprep.subr.mxu0 0.0
    %1492 = vmatpush1.msra.mxu0 0.0
    %1493 = vmatprep.mubr.f32.mxu0 0.0
    %1494 = vmatmul.mubr.f32.gmra.mrb[0].mxu0 %v1412
    %v1495 = vpop.f32.mrb[0].mxu0
    %v1496 = vadd.f32 0.0, %v1495
    %v1497 = vpop.f32.mrb[0].mxu0
    %1498 = vdwg.mxu0
    %v1499 = vlaneseq
    %v1500 = vshrl.u32 %v1499, 7
    %v1501 = vsub.s32 2, %v1500
    %v1502 = vrot.slane %v1292, %v1501
    %v1503 = vmul.f32 %v1496, %v1502
    %v1504 = vlaneseq
    %v1505 = vshrl.u32 %v1504, 7
    %v1506 = vsub.s32 3, %v1505
    %v1507 = vrot.slane %v1292, %v1506
    %v1508 = vadd.f32 %v1503, %v1507
    %v1509 = vmax.f32 %v1508, 0.0
    %v1510 = vld [vmem:[#allocation2 + $0x198] sm:$0xff]
    %v1511 = vld [vmem:[#allocation2 + $0x1a0] sm:$0xff]
    %v1512 = vld [vmem:[#allocation2 + $0x1a8] sm:$0xff]
    %v1513 = vld [vmem:[#allocation2 + $0x1b0] sm:$0xff]
    %v1514 = vld [vmem:[#allocation2 + $0x1b8] sm:$0xff]
    %v1515 = vld [vmem:[#allocation2 + $0x1c0] sm:$0xff]
    %v1516 = vld [vmem:[#allocation2 + $0x1c8] sm:$0xff]
    %v1517 = vld [vmem:[#allocation2 + $0x1d0] sm:$0xff]
    %v1518 = vld [vmem:[#allocation2 + $0x1d8] sm:$0xff]
    %v1519 = vld [vmem:[#allocation2 + $0x1e0] sm:$0xff]
    %v1520 = vld [vmem:[#allocation2 + $0x1e8] sm:$0xff]
    %v1521 = vld [vmem:[#allocation2 + $0x1f0] sm:$0xff]
    %v1522 = vld [vmem:[#allocation2 + $0x1f8] sm:$0xff]
    %v1523 = vld [vmem:[#allocation2 + $0x200] sm:$0xff]
    %v1524 = vld [vmem:[#allocation2 + $0x208] sm:$0xff]
    %v1525 = vld [vmem:[#allocation2 + $0x210] sm:$0xff]
    %1526 = vmatprep.subr.mxu0 0.0
    %1527 = vmatpush1.msra.mxu0 %v1510
    %1528 = vmatprep.subr.mxu0 0.0
    %1529 = vmatpush1.msra.mxu0 %v1511
    %1530 = vmatprep.subr.mxu0 0.0
    %1531 = vmatpush1.msra.mxu0 %v1512
    %1532 = vmatprep.subr.mxu0 0.0
    %1533 = vmatpush1.msra.mxu0 %v1513
    %1534 = vmatprep.subr.mxu0 0.0
    %1535 = vmatpush1.msra.mxu0 %v1514
    %1536 = vmatprep.subr.mxu0 0.0
    %1537 = vmatpush1.msra.mxu0 %v1515
    %1538 = vmatprep.subr.mxu0 0.0
    %1539 = vmatpush1.msra.mxu0 %v1516
    %1540 = vmatprep.subr.mxu0 0.0
    %1541 = vmatpush1.msra.mxu0 %v1517
    %1542 = vmatprep.subr.mxu0 0.0
    %1543 = vmatpush1.msra.mxu0 %v1518
    %1544 = vmatprep.subr.mxu0 0.0
    %1545 = vmatpush1.msra.mxu0 %v1519
    %1546 = vmatprep.subr.mxu0 0.0
    %1547 = vmatpush1.msra.mxu0 %v1520
    %1548 = vmatprep.subr.mxu0 0.0
    %1549 = vmatpush1.msra.mxu0 %v1521
    %1550 = vmatprep.subr.mxu0 0.0
    %1551 = vmatpush1.msra.mxu0 %v1522
    %1552 = vmatprep.subr.mxu0 0.0
    %1553 = vmatpush1.msra.mxu0 %v1523
    %1554 = vmatprep.subr.mxu0 0.0
    %1555 = vmatpush1.msra.mxu0 %v1524
    %1556 = vmatprep.subr.mxu0 0.0
    %1557 = vmatpush1.msra.mxu0 %v1525
    %1558 = vmatprep.subr.mxu0 0.0
    %1559 = vmatpush1.msra.mxu0 0.0
    %1560 = vmatprep.subr.mxu0 0.0
    %1561 = vmatpush1.msra.mxu0 0.0
    %1562 = vmatprep.subr.mxu0 0.0
    %1563 = vmatpush1.msra.mxu0 0.0
    %1564 = vmatprep.subr.mxu0 0.0
    %1565 = vmatpush1.msra.mxu0 0.0
    %1566 = vmatprep.subr.mxu0 0.0
    %1567 = vmatpush1.msra.mxu0 0.0
    %1568 = vmatprep.subr.mxu0 0.0
    %1569 = vmatpush1.msra.mxu0 0.0
    %1570 = vmatprep.subr.mxu0 0.0
    %1571 = vmatpush1.msra.mxu0 0.0
    %1572 = vmatprep.subr.mxu0 0.0
    %1573 = vmatpush1.msra.mxu0 0.0
    %1574 = vmatprep.subr.mxu0 0.0
    %1575 = vmatpush1.msra.mxu0 0.0
    %1576 = vmatprep.subr.mxu0 0.0
    %1577 = vmatpush1.msra.mxu0 0.0
    %1578 = vmatprep.subr.mxu0 0.0
    %1579 = vmatpush1.msra.mxu0 0.0
    %1580 = vmatprep.subr.mxu0 0.0
    %1581 = vmatpush1.msra.mxu0 0.0
    %1582 = vmatprep.subr.mxu0 0.0
    %1583 = vmatpush1.msra.mxu0 0.0
    %1584 = vmatprep.subr.mxu0 0.0
    %1585 = vmatpush1.msra.mxu0 0.0
    %1586 = vmatprep.subr.mxu0 0.0
    %1587 = vmatpush1.msra.mxu0 0.0
    %1588 = vmatprep.subr.mxu0 0.0
    %1589 = vmatpush1.msra.mxu0 0.0
    %1590 = vmatprep.mubr.f32.mxu0 0.0
    %1591 = vmatmul.mubr.f32.gmra.mrb[0].mxu0 %v1509
    %v1592 = vpop.f32.mrb[0].mxu0
    %v1593 = vadd.f32 0.0, %v1592
    %v1594 = vpop.f32.mrb[0].mxu0
    %1595 = vdwg.mxu0
    %v1596 = vlaneseq
    %v1597 = vshrl.u32 %v1596, 7
    %v1598 = vsub.s32 4, %v1597
    %v1599 = vrot.slane %v1292, %v1598
    %v1600 = vmul.f32 %v1593, %v1599
    %v1601 = vlaneseq
    %v1602 = vshrl.u32 %v1601, 7
    %v1603 = vsub.s32 5, %v1602
    %v1604 = vrot.slane %v1292, %v1603
    %v1605 = vadd.f32 %v1600, %v1604
    %v1606 = vmax.f32 %v1605, 0.0
    %v1607 = vld [vmem:[#allocation2 + $0x218] sm:$0xff]
    %v1608 = vld [vmem:[#allocation2 + $0x220] sm:$0xff]
    %v1609 = vld [vmem:[#allocation2 + $0x228] sm:$0xff]
    %v1610 = vld [vmem:[#allocation2 + $0x230] sm:$0xff]
    %v1611 = vld [vmem:[#allocation2 + $0x238] sm:$0xff]
    %v1612 = vld [vmem:[#allocation2 + $0x240] sm:$0xff]
    %v1613 = vld [vmem:[#allocation2 + $0x248] sm:$0xff]
    %v1614 = vld [vmem:[#allocation2 + $0x250] sm:$0xff]
    %v1615 = vld [vmem:[#allocation2 + $0x258] sm:$0xff]
    %v1616 = vld [vmem:[#allocation2 + $0x260] sm:$0xff]
    %v1617 = vld [vmem:[#allocation2 + $0x268] sm:$0xff]
    %v1618 = vld [vmem:[#allocation2 + $0x270] sm:$0xff]
    %v1619 = vld [vmem:[#allocation2 + $0x278] sm:$0xff]
    %v1620 = vld [vmem:[#allocation2 + $0x280] sm:$0xff]
    %v1621 = vld [vmem:[#allocation2 + $0x288] sm:$0xff]
    %v1622 = vld [vmem:[#allocation2 + $0x290] sm:$0xff]
    %v1623 = vlaneseq
    %v1624 = vshrl.u32 %v1623, 7
    %v1625 = vsub.s32 6, %v1624
    %v1626 = vrot.slane %v1292, %v1625
    %1627 = vmatprep.subr.mxu0 0.0
    %1628 = vmatpush1.msra.mxu0 %v1607
    %1629 = vmatprep.subr.mxu0 0.0
    %1630 = vmatpush1.msra.mxu0 %v1608
    %1631 = vmatprep.subr.mxu0 0.0
    %1632 = vmatpush1.msra.mxu0 %v1609
    %1633 = vmatprep.subr.mxu0 0.0
    %1634 = vmatpush1.msra.mxu0 %v1610
    %1635 = vmatprep.subr.mxu0 0.0
    %1636 = vmatpush1.msra.mxu0 %v1611
    %1637 = vmatprep.subr.mxu0 0.0
    %1638 = vmatpush1.msra.mxu0 %v1612
    %1639 = vmatprep.subr.mxu0 0.0
    %1640 = vmatpush1.msra.mxu0 %v1613
    %1641 = vmatprep.subr.mxu0 0.0
    %1642 = vmatpush1.msra.mxu0 %v1614
    %1643 = vmatprep.subr.mxu0 0.0
    %1644 = vmatpush1.msra.mxu0 %v1615
    %1645 = vmatprep.subr.mxu0 0.0
    %1646 = vmatpush1.msra.mxu0 %v1616
    %1647 = vmatprep.subr.mxu0 0.0
    %1648 = vmatpush1.msra.mxu0 %v1617
    %1649 = vmatprep.subr.mxu0 0.0
    %1650 = vmatpush1.msra.mxu0 %v1618
    %1651 = vmatprep.subr.mxu0 0.0
    %1652 = vmatpush1.msra.mxu0 %v1619
    %1653 = vmatprep.subr.mxu0 0.0
    %1654 = vmatpush1.msra.mxu0 %v1620
    %1655 = vmatprep.subr.mxu0 0.0
    %1656 = vmatpush1.msra.mxu0 %v1621
    %1657 = vmatprep.subr.mxu0 0.0
    %1658 = vmatpush1.msra.mxu0 %v1622
    %1659 = vmatprep.subr.mxu0 0.0
    %1660 = vmatpush1.msra.mxu0 0.0
    %1661 = vmatprep.subr.mxu0 0.0
    %1662 = vmatpush1.msra.mxu0 0.0
    %1663 = vmatprep.subr.mxu0 0.0
    %1664 = vmatpush1.msra.mxu0 0.0
    %1665 = vmatprep.subr.mxu0 0.0
    %1666 = vmatpush1.msra.mxu0 0.0
    %1667 = vmatprep.subr.mxu0 0.0
    %1668 = vmatpush1.msra.mxu0 0.0
    %1669 = vmatprep.subr.mxu0 0.0
    %1670 = vmatpush1.msra.mxu0 0.0
    %1671 = vmatprep.subr.mxu0 0.0
    %1672 = vmatpush1.msra.mxu0 0.0
    %1673 = vmatprep.subr.mxu0 0.0
    %1674 = vmatpush1.msra.mxu0 0.0
    %1675 = vmatprep.subr.mxu0 0.0
    %1676 = vmatpush1.msra.mxu0 0.0
    %1677 = vmatprep.subr.mxu0 0.0
    %1678 = vmatpush1.msra.mxu0 0.0
    %1679 = vmatprep.subr.mxu0 0.0
    %1680 = vmatpush1.msra.mxu0 0.0
    %1681 = vmatprep.subr.mxu0 0.0
    %1682 = vmatpush1.msra.mxu0 0.0
    %1683 = vmatprep.subr.mxu0 0.0
    %1684 = vmatpush1.msra.mxu0 0.0
    %1685 = vmatprep.subr.mxu0 0.0
    %1686 = vmatpush1.msra.mxu0 0.0
    %1687 = vmatprep.subr.mxu0 0.0
    %1688 = vmatpush1.msra.mxu0 0.0
    %1689 = vmatprep.subr.mxu0 0.0
    %1690 = vmatpush1.msra.mxu0 0.0
    %1691 = vmatprep.mubr.f32.mxu0 0.0
    %1692 = vmatmul.mubr.f32.gmra.mrb[0].mxu0 %v1606
    %v1693 = vpop.f32.mrb[0].mxu0
    %v1694 = vadd.f32 %v1626, %v1693
    %v1695 = vpop.f32.mrb[0].mxu0
    %1696 = vdwg.mxu0
    %v1697 = vxor.u32 %v1694, 2147483648
    %v1698 = vmul.f32 %v1697, 1.442695
    %v1699 = vpow.pop %v1698
    %v1700 = vadd.f32 %v1699, 1.0
    %v1701 = vrcp.pop %v1700
    %v1702 = vmul.f32 1.0, %v1701
    %1703 = vst [vmem:[#allocation5] sm:$0xff] %v1702
    // Predicated region
    $region18: #{tpu_custom_call.1} parent=1 // pred_check
      _
    $region19: #{tpu_custom_call.1} parent=1 // pred_check_branch
      %1705 = sbr.rel (0) target = $region21
    $region20: #{tpu_custom_call.1} parent=1 // pred_region
      %s1707 = ssub.s32 128, 128
      %1708 = vsyncadd [#allocation4], %s1707
      %s1710 = sshll.u32 [#allocation5], 4
      %s1711 = int_to_ptr.vmem [resolvable:$true] %s1710
      %1713 = dma.vmem_to_hbm [thread:$0]  %s1711, 128, %s3, [#allocation4]
    $region21: #{tpu_custom_call.1} parent=1 // pred_fallthru
      _
    // Predicated region
    $region22: #{tpu_custom_call.1} parent=1 // pred_check
      _
    $region23: #{tpu_custom_call.1} parent=1 // pred_check_branch
      %1715 = sbr.rel (0) target = $region25
    $region24: #{tpu_custom_call.1} parent=1 // pred_region
      %1716 = dma.done [#allocation4], 128
    $region25: #{tpu_custom_call.1} parent=1 // pred_fallthru
      _
    %1717 = vsyncpa [#allocation3], 1
    %1718 = vsyncpa [#allocation4], 1

</llo_original>
